<compile_context>
chip_gen: v7x
topology: tpu7x:2x2x1
jax: 0.10.0
libtpu: 0.0.40
codegen_flags: <defaults>
</compile_context>

<pallas_src>
import functools

import jax
import jax.numpy as jnp
import numpy as np
from jax.experimental import pallas as pl
from jax.experimental.pallas import tpu as pltpu

ALPHA = 16.0          # Scale
DROP_P = 0.2          # nn.Dropout(p=0.2), train mode (forward == fwd_train)
KEEP_P = 1.0 - DROP_P
EPS = 1e-10
NEG_INF = -1e30       # bias for padded (fake) classes

TK_MAX = 2304         # K-reduction tile (divides the real K = 1280*9 = 11520)
TC_MAX = 1024         # class tile (lane-dense; 1 MB bf16 weight tile at D=512)


def _round_up(x, m):
    return (x + m - 1) // m * m


# --------------------------------------------------------------------------
# Kernel 1: dropout -> conv-as-matmul (K-tiled reduction) -> L2 normalize.
# --------------------------------------------------------------------------
def _feat_kernel(x_ref, mask_ref, wc_ref, feat_ref, acc_ref):
    k = pl.program_id(0)

    @pl.when(k == 0)
    def _init():
        acc_ref[...] = jnp.zeros_like(acc_ref)

    # dropout (train mode): x * keep_mask / keep_prob, then bf16 for the MXU.
    xd = (x_ref[...] * mask_ref[...]).astype(jnp.bfloat16)
    acc_ref[...] += jnp.dot(xd, wc_ref[...], preferred_element_type=jnp.float32)

    @pl.when(k == pl.num_programs(0) - 1)
    def _finalize():
        f = acc_ref[...]
        l2 = jnp.sqrt(jnp.sum(f * f, axis=-1, keepdims=True))
        feat_ref[...] = ALPHA * f / (l2 + EPS)


# --------------------------------------------------------------------------
# Kernel 2: Linear(dim, num_classes) tiled over (padded) classes.
# --------------------------------------------------------------------------
def _dense_kernel(feat_ref, wd_ref, b_ref, out_ref):
    f = feat_ref[...].astype(jnp.bfloat16)
    out_ref[...] = (
        jnp.dot(f, wd_ref[...], preferred_element_type=jnp.float32) + b_ref[...]
    )


# --------------------------------------------------------------------------
# Kernel 3: row-wise log_softmax (padded classes have -1e30 logits).
# --------------------------------------------------------------------------
def _log_softmax_kernel(z_ref, out_ref):
    z = z_ref[...]
    m = jnp.max(z, axis=-1, keepdims=True)
    zz = z - m
    lse = jnp.log(jnp.sum(jnp.exp(zz), axis=-1, keepdims=True))
    out_ref[...] = zz - lse


# --------------------------------------------------------------------------
# One-time weight re-layout (outside the per-step forward): contiguous
# [K, D] / [D, C_pad] bf16 weights, padded class bias.
# --------------------------------------------------------------------------
def prepare_params(conv_w, dense_w, dense_b):
    d, cin, kh, kw = conv_w.shape
    c = dense_w.shape[0]
    k = cin * kh * kw

    tk = min(TK_MAX, _round_up(k, 128))
    k_pad = _round_up(k, tk)
    tc = min(TC_MAX, _round_up(c, 128))
    c_pad = _round_up(c, tc)

    wc = jnp.asarray(conv_w, jnp.float32).reshape(d, k).T            # [K, D]
    wc = jnp.pad(wc, ((0, k_pad - k), (0, 0))).astype(jnp.bfloat16)
    wd = jnp.asarray(dense_w, jnp.float32).T                         # [D, C]
    wd = jnp.pad(wd, ((0, 0), (0, c_pad - c))).astype(jnp.bfloat16)
    bd = jnp.pad(jnp.asarray(dense_b, jnp.float32), (0, c_pad - c),
                 constant_values=NEG_INF).reshape(1, c_pad)
    return wc, wd, bd


@functools.partial(jax.jit, static_argnames=("num_classes",))
def l2constrained_forward(x_nchw, drop_mask, wc, wd, bd, *, num_classes):
    """fwd_train of L2ConstraintedNet (post-backbone).

    x_nchw   : [N, C_in, 3, 3] backbone feature map (f32, NCHW)
    drop_mask: [N, C_in*9]     scaled keep-mask (keep / keep_prob, f32)
    wc       : [K_pad, D]      bf16 conv weight   (from prepare_params)
    wd       : [D, C_pad]      bf16 dense weight  (from prepare_params)
    bd       : [1, C_pad]      f32 dense bias, padded classes = -1e30
    returns  : [N, num_classes] log-probabilities (f32)
    """
    n, cin, h, w = x_nchw.shape
    assert (h, w) == (3, 3), "conv output must be 1x1 for the .view() to hold"
    k = cin * h * w
    k_pad, d = wc.shape
    c_pad = wd.shape[1]
    tk = min(TK_MAX, k_pad)
    tc = min(TC_MAX, c_pad)

    x_flat = x_nchw.reshape(n, k)
    if k_pad > k:
        pad = ((0, 0), (0, k_pad - k))
        x_flat = jnp.pad(x_flat, pad)
        drop_mask = jnp.pad(drop_mask, pad)

    # 1) dropout + conv-as-matmul, K-tiled reduction, L2 constraint finalize.
    feat = pl.pallas_call(
        _feat_kernel,
        out_shape=jax.ShapeDtypeStruct((n, d), jnp.float32),
        grid=(k_pad // tk,),
        in_specs=[
            pl.BlockSpec((n, tk), lambda kk: (0, kk)),   # x tile
            pl.BlockSpec((n, tk), lambda kk: (0, kk)),   # dropout mask tile
            pl.BlockSpec((tk, d), lambda kk: (kk, 0)),   # conv weight tile
        ],
        out_specs=pl.BlockSpec((n, d), lambda kk: (0, 0)),
        scratch_shapes=[pltpu.VMEM((n, d), jnp.float32)],
        compiler_params=pltpu.CompilerParams(
            dimension_semantics=("arbitrary",)),
    )(x_flat, drop_mask, wc)

    # 2) dense matmul, class-tiled; "parallel" axis -> megacore sharding.
    logits = pl.pallas_call(
        _dense_kernel,
        out_shape=jax.ShapeDtypeStruct((n, c_pad), jnp.float32),
        grid=(c_pad // tc,),
        in_specs=[
            pl.BlockSpec((n, d), lambda j: (0, 0)),      # feat (resident)
            pl.BlockSpec((d, tc), lambda j: (0, j)),     # dense weight tile
            pl.BlockSpec((1, tc), lambda j: (0, j)),     # bias tile
        ],
        out_specs=pl.BlockSpec((n, tc), lambda j: (0, j)),
        compiler_params=pltpu.CompilerParams(
            dimension_semantics=("parallel",)),
    )(feat, wd, bd)

    # 3) log_softmax finalize over the full (padded) class row.
    logp = pl.pallas_call(
        _log_softmax_kernel,
        out_shape=jax.ShapeDtypeStruct((n, c_pad), jnp.float32),
        in_specs=[pl.BlockSpec(memory_space=pltpu.MemorySpace.VMEM)],
        out_specs=pl.BlockSpec(memory_space=pltpu.MemorySpace.VMEM),
    )(logits)

    return logp[:, :num_classes]


# --------------------------------------------------------------------------
# Pure-JAX reference with the same bf16 matmul casts (for validation).
# --------------------------------------------------------------------------
def _reference_forward(x_nchw, drop_mask, conv_w, dense_w, dense_b):
    n, cin, h, w = x_nchw.shape
    k = cin * h * w
    xd = x_nchw.reshape(n, k) * drop_mask
    wc = conv_w.reshape(conv_w.shape[0], k).T
    feat = jnp.dot(xd.astype(jnp.bfloat16), wc.astype(jnp.bfloat16),
                   preferred_element_type=jnp.float32)
    l2 = jnp.sqrt(jnp.sum(feat * feat, axis=-1, keepdims=True))
    feat = ALPHA * feat / (l2 + EPS)
    logits = jnp.dot(feat.astype(jnp.bfloat16),
                     dense_w.T.astype(jnp.bfloat16),
                     preferred_element_type=jnp.float32) + dense_b
    return jax.nn.log_softmax(logits, axis=-1)


if __name__ == "__main__":
    # Small stand-ins for the real (1280, 512, 8547) head, chosen so both the
    # K-reduction (2 tiles) and the class axis (2 tiles + padded classes) are
    # actually exercised.
    N, CIN, DIM, NUM_CLASSES = 4, 272, 128, 1200

    key = jax.random.PRNGKey(0)
    kx, kc, kdw, kdb, kdrop = jax.random.split(key, 5)
    x = jax.random.normal(kx, (N, CIN, 3, 3), jnp.float32)            # NCHW
    conv_w = 0.05 * jax.random.normal(kc, (DIM, CIN, 3, 3), jnp.float32)
    dense_w = 0.05 * jax.random.normal(kdw, (NUM_CLASSES, DIM), jnp.float32)
    dense_b = 0.01 * jax.random.normal(kdb, (NUM_CLASSES,), jnp.float32)

    # nn.Dropout(p=0.2) train-mode mask, scaled by 1/keep_prob.
    k_feat = CIN * 3 * 3
    keep = jax.random.bernoulli(kdrop, KEEP_P, (N, k_feat))
    drop_mask = keep.astype(jnp.float32) * (1.0 / KEEP_P)

    wc, wd, bd = prepare_params(conv_w, dense_w, dense_b)
    out = l2constrained_forward(x, drop_mask, wc, wd, bd,
                                num_classes=NUM_CLASSES)
    out = jax.block_until_ready(out)

    out_np = np.asarray(out)
    assert out_np.shape == (N, NUM_CLASSES)
    assert np.all(np.isfinite(out_np))
    # log_softmax rows must exponentiate-sum to 1 (padded classes excluded)
    assert np.allclose(np.exp(out_np).sum(axis=-1), 1.0, atol=1e-3)

    ref = np.asarray(_reference_forward(x, drop_mask, conv_w, dense_w, dense_b))
    assert np.allclose(out_np, ref, atol=2e-2, rtol=2e-2), \
        float(np.abs(out_np - ref).max())

    print("KERNEL_OK")
</pallas_src>

<mosaic_0001>
module attributes {stable_mosaic.version = 11 : i64} {
  func.func @_feat_kernel(%arg0: i32, %arg1: memref<4x2304xf32, #tpu.memory_space<vmem>>, %arg2: memref<4x2304xf32, #tpu.memory_space<vmem>>, %arg3: memref<2304x128xbf16, #tpu.memory_space<vmem>>, %arg4: memref<4x128xf32, #tpu.memory_space<vmem>>, %arg5: memref<4x128xf32, #tpu.memory_space<vmem>>) attributes {dimension_semantics = [#tpu.dimension_semantics<arbitrary>], iteration_bounds = array<i64: 2>, scalar_prefetch = 0 : i64, scratch_operands = 1 : i64, tpu.core_type = #tpu.core_type<tc>, window_params = [{transform_indices = @transform_0, window_bounds = array<i64: 4, 2304>}, {transform_indices = @transform_1, window_bounds = array<i64: 4, 2304>}, {transform_indices = @transform_2, window_bounds = array<i64: 2304, 128>}, {pipeline_mode = #tpu.pipeline_mode<synchronous>, transform_indices = @transform_3, window_bounds = array<i64: 4, 128>}]} {
    %c0_i32 = arith.constant 0 : i32
    %0 = arith.cmpi eq, %arg0, %c0_i32 : i32
    %1 = arith.extui %0 : i1 to i32
    %c0_i32_0 = arith.constant 0 : i32
    %2 = arith.cmpi ne, %1, %c0_i32_0 : i32
    scf.if %2 {
      %cst_11 = arith.constant 0.000000e+00 : f32
      %15 = vector.broadcast %cst_11 : f32 to vector<4x128xf32>
      %c0_12 = arith.constant 0 : index
      %c0_13 = arith.constant 0 : index
      %16 = vector.load %arg5[%c0_12, %c0_13] : memref<4x128xf32, #tpu.memory_space<vmem>>, vector<4x128xf32>
      tpu.vector_store %arg5[%c0_12, %c0_13], %15 {strides = array<i32>} : memref<4x128xf32, #tpu.memory_space<vmem>>, vector<4x128xf32>,
    } else {
    }
    %c0 = arith.constant 0 : index
    %c0_1 = arith.constant 0 : index
    %3 = vector.load %arg1[%c0, %c0_1] : memref<4x2304xf32, #tpu.memory_space<vmem>>, vector<4x2304xf32>
    %c0_2 = arith.constant 0 : index
    %c0_3 = arith.constant 0 : index
    %4 = vector.load %arg2[%c0_2, %c0_3] : memref<4x2304xf32, #tpu.memory_space<vmem>>, vector<4x2304xf32>
    %5 = arith.mulf %3, %4 : vector<4x2304xf32>
    %6 = arith.truncf %5 : vector<4x2304xf32> to vector<4x2304xbf16>
    %c0_4 = arith.constant 0 : index
    %c0_5 = arith.constant 0 : index
    %7 = vector.load %arg5[%c0_4, %c0_5] : memref<4x128xf32, #tpu.memory_space<vmem>>, vector<4x128xf32>
    %c0_6 = arith.constant 0 : index
    %c0_7 = arith.constant 0 : index
    %8 = vector.load %arg3[%c0_6, %c0_7] : memref<2304x128xbf16, #tpu.memory_space<vmem>>, vector<2304x128xbf16>
    %cst = arith.constant dense<0.000000e+00> : vector<4x128xf32>
    %9 = tpu.matmul %6, %8, %cst {dimension_numbers = #tpu.dot_dimension_numbers<[1], [0], [0], [1], [0, 0, 1, 1], [], []>} : vector<4x2304xbf16>, vector<2304x128xbf16>, vector<4x128xf32> -> vector<4x128xf32>
    %10 = arith.addf %7, %9 : vector<4x128xf32>
    %c0_8 = arith.constant 0 : index
    %c0_9 = arith.constant 0 : index
    %11 = vector.load %arg5[%c0_8, %c0_9] : memref<4x128xf32, #tpu.memory_space<vmem>>, vector<4x128xf32>
    tpu.vector_store %arg5[%c0_8, %c0_9], %10 {strides = array<i32>} : memref<4x128xf32, #tpu.memory_space<vmem>>, vector<4x128xf32>,
    %c1_i32 = arith.constant 1 : i32
    %12 = arith.cmpi eq, %arg0, %c1_i32 : i32
    %13 = arith.extui %12 : i1 to i32
    %c0_i32_10 = arith.constant 0 : i32
    %14 = arith.cmpi ne, %13, %c0_i32_10 : i32
    scf.if %14 {
      %c0_11 = arith.constant 0 : index
      %c0_12 = arith.constant 0 : index
      %15 = vector.load %arg5[%c0_11, %c0_12] : memref<4x128xf32, #tpu.memory_space<vmem>>, vector<4x128xf32>
      %16 = arith.mulf %15, %15 : vector<4x128xf32>
      %cst_13 = arith.constant dense<0.000000e+00> : vector<4xf32>
      %17 = vector.multi_reduction <add>, %16, %cst_13 [1] : vector<4x128xf32> to vector<4xf32>
      %18 = vector.shape_cast %17 : vector<4xf32> to vector<4x1xf32>
      %19 = math.sqrt %18 : vector<4x1xf32>
      %cst_14 = arith.constant 1.600000e+01 : f32
      %20 = vector.broadcast %cst_14 : f32 to vector<4x128xf32>
      %21 = arith.mulf %20, %15 : vector<4x128xf32>
      %cst_15 = arith.constant 1.000000e-10 : f32
      %22 = vector.broadcast %cst_15 : f32 to vector<4x1xf32>
      %23 = arith.addf %19, %22 : vector<4x1xf32>
      %24 = vector.broadcast %23 : vector<4x1xf32> to vector<4x128xf32>
      %25 = arith.divf %21, %24 : vector<4x128xf32>
      %c0_16 = arith.constant 0 : index
      %c0_17 = arith.constant 0 : index
      %26 = vector.load %arg4[%c0_16, %c0_17] : memref<4x128xf32, #tpu.memory_space<vmem>>, vector<4x128xf32>
      tpu.vector_store %arg4[%c0_16, %c0_17], %25 {strides = array<i32>} : memref<4x128xf32, #tpu.memory_space<vmem>>, vector<4x128xf32>,
    } else {
    }
    return
  }
  func.func @transform_0(%arg0: i32) -> (i32, i32) {
    %c0_i32 = arith.constant 0 : i32
    %c0_i32_0 = arith.constant 0 : i32
    return %c0_i32, %arg0 : i32, i32
  }
  func.func @transform_1(%arg0: i32) -> (i32, i32) {
    %c0_i32 = arith.constant 0 : i32
    %c0_i32_0 = arith.constant 0 : i32
    return %c0_i32, %arg0 : i32, i32
  }
  func.func @transform_2(%arg0: i32) -> (i32, i32) {
    %c0_i32 = arith.constant 0 : i32
    %c0_i32_0 = arith.constant 0 : i32
    return %arg0, %c0_i32 : i32, i32
  }
  func.func @transform_3(%arg0: i32) -> (i32, i32) {
    %c0_i32 = arith.constant 0 : i32
    %c0_i32_0 = arith.constant 0 : i32
    %c0_i32_1 = arith.constant 0 : i32
    return %c0_i32, %c0_i32_0 : i32, i32
  }
}

module attributes {stable_mosaic.version = 11 : i64} {
  func.func @_dense_kernel(%arg0: i32, %arg1: memref<4x128xf32, #tpu.memory_space<vmem>>, %arg2: memref<128x1024xbf16, #tpu.memory_space<vmem>>, %arg3: memref<1x1024xf32, #tpu.memory_space<vmem>>, %arg4: memref<4x1024xf32, #tpu.memory_space<vmem>>) attributes {dimension_semantics = [#tpu.dimension_semantics<parallel>], iteration_bounds = array<i64: 2>, scalar_prefetch = 0 : i64, scratch_operands = 0 : i64, tpu.core_type = #tpu.core_type<tc>, window_params = [{pipeline_mode = #tpu.pipeline_mode<synchronous>, transform_indices = @transform_0, window_bounds = array<i64: 4, 128>}, {transform_indices = @transform_1, window_bounds = array<i64: 128, 1024>}, {transform_indices = @transform_2, window_bounds = array<i64: 1, 1024>}, {transform_indices = @transform_3, window_bounds = array<i64: 4, 1024>}]} {
    %c0 = arith.constant 0 : index
    %c0_0 = arith.constant 0 : index
    %0 = vector.load %arg1[%c0, %c0_0] : memref<4x128xf32, #tpu.memory_space<vmem>>, vector<4x128xf32>
    %1 = arith.truncf %0 : vector<4x128xf32> to vector<4x128xbf16>
    %c0_1 = arith.constant 0 : index
    %c0_2 = arith.constant 0 : index
    %2 = vector.load %arg2[%c0_1, %c0_2] : memref<128x1024xbf16, #tpu.memory_space<vmem>>, vector<128x1024xbf16>
    %cst = arith.constant dense<0.000000e+00> : vector<4x1024xf32>
    %3 = tpu.matmul %1, %2, %cst {dimension_numbers = #tpu.dot_dimension_numbers<[1], [0], [0], [1], [0, 0, 1, 1], [], []>} : vector<4x128xbf16>, vector<128x1024xbf16>, vector<4x1024xf32> -> vector<4x1024xf32>
    %c0_3 = arith.constant 0 : index
    %c0_4 = arith.constant 0 : index
    %4 = vector.load %arg3[%c0_3, %c0_4] : memref<1x1024xf32, #tpu.memory_space<vmem>>, vector<1x1024xf32>
    %5 = vector.broadcast %4 : vector<1x1024xf32> to vector<4x1024xf32>
    %6 = arith.addf %3, %5 : vector<4x1024xf32>
    %c0_5 = arith.constant 0 : index
    %c0_6 = arith.constant 0 : index
    %7 = vector.load %arg4[%c0_5, %c0_6] : memref<4x1024xf32, #tpu.memory_space<vmem>>, vector<4x1024xf32>
    tpu.vector_store %arg4[%c0_5, %c0_6], %6 {strides = array<i32>} : memref<4x1024xf32, #tpu.memory_space<vmem>>, vector<4x1024xf32>,
    return
  }
  func.func @transform_0(%arg0: i32) -> (i32, i32) {
    %c0_i32 = arith.constant 0 : i32
    %c0_i32_0 = arith.constant 0 : i32
    %c0_i32_1 = arith.constant 0 : i32
    return %c0_i32, %c0_i32_0 : i32, i32
  }
  func.func @transform_1(%arg0: i32) -> (i32, i32) {
    %c0_i32 = arith.constant 0 : i32
    %c0_i32_0 = arith.constant 0 : i32
    return %c0_i32, %arg0 : i32, i32
  }
  func.func @transform_2(%arg0: i32) -> (i32, i32) {
    %c0_i32 = arith.constant 0 : i32
    %c0_i32_0 = arith.constant 0 : i32
    return %c0_i32, %arg0 : i32, i32
  }
  func.func @transform_3(%arg0: i32) -> (i32, i32) {
    %c0_i32 = arith.constant 0 : i32
    %c0_i32_0 = arith.constant 0 : i32
    return %c0_i32, %arg0 : i32, i32
  }
}

module attributes {stable_mosaic.version = 11 : i64} {
  func.func @_log_softmax_kernel(%arg0: memref<4x2048xf32, #tpu.memory_space<vmem>>, %arg1: memref<4x2048xf32, #tpu.memory_space<vmem>>) attributes {dimension_semantics = [], scalar_prefetch = 0 : i64, scratch_operands = 0 : i64, tpu.core_type = #tpu.core_type<tc>} {
    %c0 = arith.constant 0 : index
    %c0_0 = arith.constant 0 : index
    %0 = vector.load %arg0[%c0, %c0_0] : memref<4x2048xf32, #tpu.memory_space<vmem>>, vector<4x2048xf32>
    %cst = arith.constant dense<0xFF800000> : vector<4xf32>
    %1 = vector.multi_reduction <maximumf>, %0, %cst [1] : vector<4x2048xf32> to vector<4xf32>
    %2 = vector.shape_cast %1 : vector<4xf32> to vector<4x1xf32>
    %3 = vector.broadcast %2 : vector<4x1xf32> to vector<4x2048xf32>
    %4 = arith.subf %0, %3 : vector<4x2048xf32>
    %5 = math.exp %4 : vector<4x2048xf32>
    %cst_1 = arith.constant dense<0.000000e+00> : vector<4xf32>
    %6 = vector.multi_reduction <add>, %5, %cst_1 [1] : vector<4x2048xf32> to vector<4xf32>
    %7 = vector.shape_cast %6 : vector<4xf32> to vector<4x1xf32>
    %8 = math.log %7 : vector<4x1xf32>
    %9 = vector.broadcast %8 : vector<4x1xf32> to vector<4x2048xf32>
    %10 = arith.subf %4, %9 : vector<4x2048xf32>
    %c0_2 = arith.constant 0 : index
    %c0_3 = arith.constant 0 : index
    %11 = vector.load %arg1[%c0_2, %c0_3] : memref<4x2048xf32, #tpu.memory_space<vmem>>, vector<4x2048xf32>
    tpu.vector_store %arg1[%c0_2, %c0_3], %10 {strides = array<i32>} : memref<4x2048xf32, #tpu.memory_space<vmem>>, vector<4x2048xf32>,
    return
  }
}

</mosaic_0001>

<llo_original>
// kernel: l2constrained_forward.5
$region0: #{l2constrained_forward.5}
  #allocation0 [shape = 'u32[]', space=smem, size = 0x4, offset = 0x4, fixed_abs, tag = 'smem constant byte address 0x4 - core index']
  #allocation1 [shape = 'u32[144,128]{1,0:T(1,128)}', space=vmem, size = 0x12000, scoped, tag = 'internal scratch']
  %s0 = inlined_call_operand.vmem [shape: f32[4,2048], index: 0, kind: input, shape index: {}]
  %s1 = inlined_call_operand.vmem [shape: f32[4,2048], index: 1, kind: output, shape index: {}]
  %s2 = sld [smem:[#allocation0]]
  $region14: #{l2constrained_forward.5} parent=0
    _
  %s4 = ssub.s32 1, %s2
  %s5 = scalar_select 0, %s4, %s2
  // Predicated region
  $region2: #{l2constrained_forward.5} parent=0 // pred_check
    _
  $region3: #{l2constrained_forward.5} parent=0 // pred_check_branch
    %7 = sbr.rel (0) target = $region5
  $region4: #{l2constrained_forward.5} parent=0 // pred_region
    _
  $region5: #{l2constrained_forward.5} parent=0 // pred_fallthru
    _
  %v8 = vld [vmem:[%s0] sm:$0xff]
  %v9 = vld [vmem:[%s0 + $0x8] sm:$0xff]
  %v10 = vld [vmem:[%s0 + $0x10] sm:$0xff]
  %v11 = vld [vmem:[%s0 + $0x18] sm:$0xff]
  %v12 = vld [vmem:[%s0 + $0x20] sm:$0xff]
  %v13 = vld [vmem:[%s0 + $0x28] sm:$0xff]
  %v14 = vld [vmem:[%s0 + $0x30] sm:$0xff]
  %v15 = vld [vmem:[%s0 + $0x38] sm:$0xff]
  %v24 = vcombine.high %v8, %v8
  %v25 = vcombine.high %v9, %v9
  %v26 = vcombine.high %v10, %v10
  %v27 = vcombine.high %v11, %v11
  %v28 = vcombine.high %v12, %v12
  %v29 = vcombine.high %v13, %v13
  %v30 = vcombine.high %v14, %v14
  %v31 = vcombine.high %v15, %v15
  %vm40 = vcmask 1043456
  %v41 = vsel %vm40, %v8, -inf
  %v42 = vsel %vm40, %v24, -inf
  %v43 = vsel %vm40, %v9, -inf
  %v44 = vsel %vm40, %v25, -inf
  %v45 = vsel %vm40, %v10, -inf
  %v46 = vmax.f32 %v41, %v45
  %v47 = vsel %vm40, %v26, -inf
  %v48 = vmax.f32 %v42, %v47
  %v49 = vsel %vm40, %v11, -inf
  %v50 = vmax.f32 %v43, %v49
  %v51 = vsel %vm40, %v27, -inf
  %v52 = vmax.f32 %v44, %v51
  %v53 = vsel %vm40, %v12, -inf
  %v54 = vmax.f32 %v46, %v53
  %v55 = vsel %vm40, %v28, -inf
  %v56 = vmax.f32 %v48, %v55
  %v57 = vsel %vm40, %v13, -inf
  %v58 = vmax.f32 %v50, %v57
  %v59 = vsel %vm40, %v29, -inf
  %v60 = vmax.f32 %v52, %v59
  %v61 = vsel %vm40, %v14, -inf
  %v62 = vmax.f32 %v54, %v61
  %v63 = vsel %vm40, %v30, -inf
  %v64 = vmax.f32 %v56, %v63
  %v65 = vsel %vm40, %v15, -inf
  %v66 = vmax.f32 %v58, %v65
  %v67 = vsel %vm40, %v31, -inf
  %v68 = vmax.f32 %v60, %v67
  %v69 = vmax.f32 %v62, %v64
  %v70 = vmax.f32 %v66, %v68
  %v71 = vmax.f32 %v69, %v70
  %72 = vmax.xlane.f32.xlu0 %v71
  %v73 = vpop.xlane.xlu0 %72
  %v76 = vunpack.c.l.s4 839922192
  %v77 = vunpack.c.0.s8 %v76
  %v78 = vlaneseq
  %v79 = vshrl.u32 %v78, 7
  %v80 = vsub.s32 %v77, %v79
  %v81 = vrot.slane %v73, %v80
  %v83 = vsub.f32 %v8, %v81
  %v84 = vsub.f32 %v9, %v81
  %v85 = vsub.f32 %v10, %v81
  %v86 = vsub.f32 %v11, %v81
  %v87 = vsub.f32 %v12, %v81
  %v88 = vsub.f32 %v13, %v81
  %v89 = vsub.f32 %v14, %v81
  %v90 = vsub.f32 %v15, %v81
  %v91 = vmul.f32 %v83, 1.442695
  %v92 = vpow.pop %v91
  %v93 = vmul.f32 %v84, 1.442695
  %v94 = vpow.pop %v93
  %v95 = vmul.f32 %v85, 1.442695
  %v96 = vpow.pop %v95
  %v97 = vmul.f32 %v86, 1.442695
  %v98 = vpow.pop %v97
  %v99 = vmul.f32 %v87, 1.442695
  %v100 = vpow.pop %v99
  %v101 = vmul.f32 %v88, 1.442695
  %v102 = vpow.pop %v101
  %v103 = vmul.f32 %v89, 1.442695
  %v104 = vpow.pop %v103
  %v105 = vmul.f32 %v90, 1.442695
  %v106 = vpow.pop %v105
  %v115 = vcombine.high %v92, %v92
  %v116 = vcombine.high %v94, %v94
  %v117 = vcombine.high %v96, %v96
  %v118 = vcombine.high %v98, %v98
  %v119 = vcombine.high %v100, %v100
  %v120 = vcombine.high %v102, %v102
  %v121 = vcombine.high %v104, %v104
  %v122 = vcombine.high %v106, %v106
  %v131 = vsel %vm40, %v92, 0.0
  %v132 = vsel %vm40, %v115, 0.0
  %v133 = vadd.f32 %v131, %v132
  %v134 = vsel %vm40, %v94, 0.0
  %v135 = vadd.f32 %v133, %v134
  %v136 = vsel %vm40, %v116, 0.0
  %v137 = vadd.f32 %v135, %v136
  %v138 = vsel %vm40, %v96, 0.0
  %v139 = vadd.f32 %v137, %v138
  %v140 = vsel %vm40, %v117, 0.0
  %v141 = vadd.f32 %v139, %v140
  %v142 = vsel %vm40, %v98, 0.0
  %v143 = vadd.f32 %v141, %v142
  %v144 = vsel %vm40, %v118, 0.0
  %v145 = vadd.f32 %v143, %v144
  %v146 = vsel %vm40, %v100, 0.0
  %v147 = vadd.f32 %v145, %v146
  %v148 = vsel %vm40, %v119, 0.0
  %v149 = vadd.f32 %v147, %v148
  %v150 = vsel %vm40, %v102, 0.0
  %v151 = vadd.f32 %v149, %v150
  %v152 = vsel %vm40, %v120, 0.0
  %v153 = vadd.f32 %v151, %v152
  %v154 = vsel %vm40, %v104, 0.0
  %v155 = vadd.f32 %v153, %v154
  %v156 = vsel %vm40, %v121, 0.0
  %v157 = vadd.f32 %v155, %v156
  %v158 = vsel %vm40, %v106, 0.0
  %v159 = vadd.f32 %v157, %v158
  %v160 = vsel %vm40, %v122, 0.0
  %v161 = vadd.f32 %v159, %v160
  %162 = vadd.xlane.f32.xlu0 %v161
  %v163 = vpop.xlane.xlu0 %162
  %v164 = vlog2.pop %v163
  %v165 = vmul.f32 %v164, 0.6931472
  %v168 = vunpack.c.l.s4 839922192
  %v169 = vunpack.c.0.s8 %v168
  %v170 = vlaneseq
  %v171 = vshrl.u32 %v170, 7
  %v172 = vsub.s32 %v169, %v171
  %v173 = vrot.slane %v165, %v172
  %v175 = vsub.f32 %v83, %v173
  %v176 = vsub.f32 %v84, %v173
  %v177 = vsub.f32 %v85, %v173
  %v178 = vsub.f32 %v86, %v173
  %v179 = vsub.f32 %v87, %v173
  %v180 = vsub.f32 %v88, %v173
  %v181 = vsub.f32 %v89, %v173
  %v182 = vsub.f32 %v90, %v173
  %183 = vst [vmem:[%s1] sm:$0xff] %v175
  %184 = vst [vmem:[%s1 + $0x8] sm:$0xff] %v176
  %185 = vst [vmem:[%s1 + $0x10] sm:$0xff] %v177
  %186 = vst [vmem:[%s1 + $0x18] sm:$0xff] %v178
  %187 = vst [vmem:[%s1 + $0x20] sm:$0xff] %v179
  %188 = vst [vmem:[%s1 + $0x28] sm:$0xff] %v180
  %189 = vst [vmem:[%s1 + $0x30] sm:$0xff] %v181
  %190 = vst [vmem:[%s1 + $0x38] sm:$0xff] %v182
  // Predicated region
  $region6: #{l2constrained_forward.5} parent=0 // pred_check
    _
  $region7: #{l2constrained_forward.5} parent=0 // pred_check_branch
    %192 = sbr.rel (0) target = $region9
  $region8: #{l2constrained_forward.5} parent=0 // pred_region
    _
  $region9: #{l2constrained_forward.5} parent=0 // pred_fallthru
    _
  // Predicated region
  $region10: #{l2constrained_forward.5} parent=0 // pred_check
    _
  $region11: #{l2constrained_forward.5} parent=0 // pred_check_branch
    %194 = sbr.rel (0) target = $region13
  $region12: #{l2constrained_forward.5} parent=0 // pred_region
    _
  $region13: #{l2constrained_forward.5} parent=0 // pred_fallthru
    _

// kernel: l2constrained_forward.4
$region0: #{l2constrained_forward.4}
  #allocation0 [shape = 'u32[]', space=smem, size = 0x4, offset = 0x4, fixed_abs, tag = 'smem constant byte address 0x4 - core index']
  #allocation1 [shape = 'u32[144,128]{1,0:T(1,128)}', space=vmem, size = 0x12000, scoped, tag = 'internal scratch']
  %s0 = inlined_call_operand.vmem [shape: f32[4,128], index: 0, kind: input, shape index: {}]
  %s1 = inlined_call_operand.vmem [shape: bf16[128,2048], index: 1, kind: input, shape index: {}]
  %s2 = inlined_call_operand.vmem [shape: f32[1,2048], index: 2, kind: input, shape index: {}]
  %s3 = inlined_call_operand.vmem [shape: f32[4,2048], index: 3, kind: output, shape index: {}]
  %s4 = sld [smem:[#allocation0]]
  $region68: #{l2constrained_forward.4} parent=0
    _
  %s6 = ssub.s32 1, %s4
  %s7 = scalar_select 0, %s6, %s4
  $region1: #{l2constrained_forward.4} parent=0
    #allocation2 [shape = 'u8[524288]{0}', space=vmem, size = 0x80000, scoped, tag = 'input window, operand 1']
    loop: start=0, step=1, limit=4
    $region2: #{l2constrained_forward.4} parent=1 // loop_pre_header
      _
    $region3: #{l2constrained_forward.4} parent=1 // loop_header
      %s9 = sphi 0, %s13
      %p10 = scmp.ge.s32.totalorder %s9, 4
      %s17 = sphi 0, %s17
      %s19 = sphi 0, %s17
      %s20 = sphi 0, %s19
      %s34 = sphi 0, %s20
      %s40 = sphi 0, %s42
      %s43 = sphi 0, %s40
      %s44 = sphi 0, %s43
      %s60 = sphi 0, %s44
      %s66 = sphi 0, %s68
      %s69 = sphi 0, %s66
      %s70 = sphi 0, %s69
      %s86 = sphi 0, %s70
      %s92 = sphi 0, %s94
      %s95 = sphi 0, %s92
      %s96 = sphi 0, %s95
      %s112 = sphi 0, %s96
    $region4: #{l2constrained_forward.4} parent=1 // loop_header_branch
      %12 = sbr.rel (%p10) target = $region8
    $region5: #{l2constrained_forward.4} parent=1 // loop_body
      %s14 = ssub.s32 %s9, 1
      %s15 = ssub.s32 %s9, 2
      %s16 = sadd.s32 %s9, 1
      %s18 = sadd.s32 %s17, 1
      %p21 = scmp.eq.s32.totalorder %s9, 1
      %p22 = scmp.ne.s32.totalorder %s17, %s19
      %p23 = scmp.eq.s32.totalorder %s9, 0
      %p24 = por %p22, %p23
      %p25 = scmp.ne.s32.totalorder %s17, %s19
      %p26 = scmp.eq.s32.totalorder %s14, 1
      %p27 = por %p25, %p26
      %p28 = scmp.ne.s32.totalorder %s19, %s20
      %p29 = scmp.eq.s32.totalorder %s14, 0
      %p30 = por %p28, %p29
      %p31 = scmp.ne.s32.totalorder %s19, %s20
      %p32 = scmp.eq.s32.totalorder %s15, 1
      %p33 = por %p31, %p32
      %p35 = scmp.ne.s32.totalorder %s20, %s34
      %p36 = scmp.eq.s32.totalorder %s15, 0
      %p37 = por %p35, %p36
      %s38 = ssub.s32 %s9, %s16
      %p39 = scmp.eq.s32.totalorder %s38, 0
      %s41 = sadd.s32 %s40, 1
      %s42 = scalar_select %p39, %s40, %s41
      %p45 = pneg %p39
      %p46 = scmp.eq.s32.totalorder %s9, 1
      %p47 = por %p45, %p46
      %p48 = scmp.ne.s32.totalorder %s40, %s43
      %p49 = scmp.eq.s32.totalorder %s9, 0
      %p50 = por %p48, %p49
      %p51 = scmp.ne.s32.totalorder %s40, %s43
      %p52 = scmp.eq.s32.totalorder %s14, 1
      %p53 = por %p51, %p52
      %p54 = scmp.ne.s32.totalorder %s43, %s44
      %p55 = scmp.eq.s32.totalorder %s14, 0
      %p56 = por %p54, %p55
      %p57 = scmp.ne.s32.totalorder %s43, %s44
      %p58 = scmp.eq.s32.totalorder %s15, 1
      %p59 = por %p57, %p58
      %p61 = scmp.ne.s32.totalorder %s44, %s60
      %p62 = scmp.eq.s32.totalorder %s15, 0
      %p63 = por %p61, %p62
      %s64 = ssub.s32 %s9, %s16
      %p65 = scmp.eq.s32.totalorder %s64, 0
      %s67 = sadd.s32 %s66, 1
      %s68 = scalar_select %p65, %s66, %s67
      %p71 = pneg %p65
      %p72 = scmp.eq.s32.totalorder %s9, 1
      %p73 = por %p71, %p72
      %p74 = scmp.ne.s32.totalorder %s66, %s69
      %p75 = scmp.eq.s32.totalorder %s9, 0
      %p76 = por %p74, %p75
      %p77 = scmp.ne.s32.totalorder %s66, %s69
      %p78 = scmp.eq.s32.totalorder %s14, 1
      %p79 = por %p77, %p78
      %p80 = scmp.ne.s32.totalorder %s69, %s70
      %p81 = scmp.eq.s32.totalorder %s14, 0
      %p82 = por %p80, %p81
      %p83 = scmp.ne.s32.totalorder %s69, %s70
      %p84 = scmp.eq.s32.totalorder %s15, 1
      %p85 = por %p83, %p84
      %p87 = scmp.ne.s32.totalorder %s70, %s86
      %p88 = scmp.eq.s32.totalorder %s15, 0
      %p89 = por %p87, %p88
      %s90 = ssub.s32 %s9, %s16
      %p91 = scmp.eq.s32.totalorder %s90, 0
      %s93 = sadd.s32 %s92, 1
      %s94 = scalar_select %p91, %s92, %s93
      %p97 = pneg %p91
      %p98 = scmp.eq.s32.totalorder %s9, 1
      %p99 = por %p97, %p98
      %p100 = scmp.ne.s32.totalorder %s92, %s95
      %p101 = scmp.eq.s32.totalorder %s9, 0
      %p102 = por %p100, %p101
      %p103 = scmp.ne.s32.totalorder %s92, %s95
      %p104 = scmp.eq.s32.totalorder %s14, 1
      %p105 = por %p103, %p104
      %p106 = scmp.ne.s32.totalorder %s95, %s96
      %p107 = scmp.eq.s32.totalorder %s14, 0
      %p108 = por %p106, %p107
      %p109 = scmp.ne.s32.totalorder %s95, %s96
      %p110 = scmp.eq.s32.totalorder %s15, 1
      %p111 = por %p109, %p110
      %p113 = scmp.ne.s32.totalorder %s96, %s112
      %p114 = scmp.eq.s32.totalorder %s15, 0
      %p115 = por %p113, %p114
      %p116 = scmp.le.s32.totalorder 1, %s9
      %p117 = scmp.lt.s32.totalorder %s9, 3
      %p118 = pnand %p116, %p117
      %p119 = pneg %p118
      // Predicated region
      $region9: #{l2constrained_forward.4} parent=5 // pred_check
        _
      $region10: #{l2constrained_forward.4} parent=5 // pred_check_branch
        %121 = sbr.rel (%p118) target = $region12
      $region11: #{l2constrained_forward.4} parent=5 // pred_region
        %s122 = ssub.s32 %s9, 1
        // Predicated region
        $region13: #{l2constrained_forward.4} parent=11 // pred_check
          %p123 = pneg %p30
        $region14: #{l2constrained_forward.4} parent=11 // pred_check_branch
          %125 = sbr.rel (%p123) target = $region16
        $region15: #{l2constrained_forward.4} parent=11 // pred_region
          _
        $region16: #{l2constrained_forward.4} parent=11 // pred_fallthru
          _
      $region12: #{l2constrained_forward.4} parent=5 // pred_fallthru
        _
      %p126 = scmp.lt.s32.totalorder %s9, 2
      // Predicated region
      $region17: #{l2constrained_forward.4} parent=5 // pred_check
        %p127 = pneg %p126
      $region18: #{l2constrained_forward.4} parent=5 // pred_check_branch
        %129 = sbr.rel (%p127) target = $region20
      $region19: #{l2constrained_forward.4} parent=5 // pred_region
        // Predicated region
        $region21: #{l2constrained_forward.4} parent=19 // pred_check
          %p130 = pneg %p50
        $region22: #{l2constrained_forward.4} parent=19 // pred_check_branch
          %132 = sbr.rel (%p130) target = $region24
        $region23: #{l2constrained_forward.4} parent=19 // pred_region
          %s133 = sand.u32 %s40, 1
          %s134 = sand.u32 %s40, 1
          %s135 = smul.addr %s134, 512
          %s136 = scalar_lea.vmem [#allocation2], %s135
          %s137 = smul.u32 8, %s9
          %s138 = smul.addr %s137, 4
          %s139 = scalar_lea.vmem %s1, %s138
          // Predicated region
          $region25: #{l2constrained_forward.4} parent=23 // pred_check
            _
          $region26: #{l2constrained_forward.4} parent=23 // pred_check_branch
            %141 = sbr.rel (0) target = $region28
          $region27: #{l2constrained_forward.4} parent=23 // pred_region
            // Predicated region
            $region29: #{l2constrained_forward.4} parent=27 // pred_check
              _
            $region30: #{l2constrained_forward.4} parent=27 // pred_check_branch
              %143 = sbr.rel (0) target = $region32
            $region31: #{l2constrained_forward.4} parent=27 // pred_region
              loop: start=0, step=1, limit=1
              $region33: #{l2constrained_forward.4} parent=31 // loop_pre_header
                _
              $region34: #{l2constrained_forward.4} parent=31 // loop_header
                %s145 = sphi 0, %s149
                %p146 = scmp.ge.s32.totalorder %s145, 1
                %s150 = sphi %s139, %s139
                %s151 = sphi %s136, %s136
              $region35: #{l2constrained_forward.4} parent=31 // loop_header_branch
                %148 = sbr.rel (%p146) target = $region39
              $region36: #{l2constrained_forward.4} parent=31 // loop_body
                %v152 = vld [vmem:[%s150] sm:$0xff]
                %153 = vst [vmem:[%s151] sm:$0xff] %v152
                %v154 = vld [vmem:[%s150 + $0x8] sm:$0xff]
                %155 = vst [vmem:[%s151 + $0x8] sm:$0xff] %v154
                %v156 = vld [vmem:[%s150 + $0x10] sm:$0xff]
                %157 = vst [vmem:[%s151 + $0x10] sm:$0xff] %v156
                %v158 = vld [vmem:[%s150 + $0x18] sm:$0xff]
                %159 = vst [vmem:[%s151 + $0x18] sm:$0xff] %v158
                %v160 = vld [vmem:[%s150 + $0x40] sm:$0xff]
                %161 = vst [vmem:[%s151 + $0x20] sm:$0xff] %v160
                %v162 = vld [vmem:[%s150 + $0x48] sm:$0xff]
                %163 = vst [vmem:[%s151 + $0x28] sm:$0xff] %v162
                %v164 = vld [vmem:[%s150 + $0x50] sm:$0xff]
                %165 = vst [vmem:[%s151 + $0x30] sm:$0xff] %v164
                %v166 = vld [vmem:[%s150 + $0x58] sm:$0xff]
                %167 = vst [vmem:[%s151 + $0x38] sm:$0xff] %v166
                %v168 = vld [vmem:[%s150 + $0x80] sm:$0xff]
                %169 = vst [vmem:[%s151 + $0x40] sm:$0xff] %v168
                %v170 = vld [vmem:[%s150 + $0x88] sm:$0xff]
                %171 = vst [vmem:[%s151 + $0x48] sm:$0xff] %v170
                %v172 = vld [vmem:[%s150 + $0x90] sm:$0xff]
                %173 = vst [vmem:[%s151 + $0x50] sm:$0xff] %v172
                %v174 = vld [vmem:[%s150 + $0x98] sm:$0xff]
                %175 = vst [vmem:[%s151 + $0x58] sm:$0xff] %v174
                %v176 = vld [vmem:[%s150 + $0xc0] sm:$0xff]
                %177 = vst [vmem:[%s151 + $0x60] sm:$0xff] %v176
                %v178 = vld [vmem:[%s150 + $0xc8] sm:$0xff]
                %179 = vst [vmem:[%s151 + $0x68] sm:$0xff] %v178
                %v180 = vld [vmem:[%s150 + $0xd0] sm:$0xff]
                %181 = vst [vmem:[%s151 + $0x70] sm:$0xff] %v180
                %v182 = vld [vmem:[%s150 + $0xd8] sm:$0xff]
                %183 = vst [vmem:[%s151 + $0x78] sm:$0xff] %v182
                %v184 = vld [vmem:[%s150 + $0x100] sm:$0xff]
                %185 = vst [vmem:[%s151 + $0x80] sm:$0xff] %v184
                %v186 = vld [vmem:[%s150 + $0x108] sm:$0xff]
                %187 = vst [vmem:[%s151 + $0x88] sm:$0xff] %v186
                %v188 = vld [vmem:[%s150 + $0x110] sm:$0xff]
                %189 = vst [vmem:[%s151 + $0x90] sm:$0xff] %v188
                %v190 = vld [vmem:[%s150 + $0x118] sm:$0xff]
                %191 = vst [vmem:[%s151 + $0x98] sm:$0xff] %v190
                %v192 = vld [vmem:[%s150 + $0x140] sm:$0xff]
                %193 = vst [vmem:[%s151 + $0xa0] sm:$0xff] %v192
                %v194 = vld [vmem:[%s150 + $0x148] sm:$0xff]
                %195 = vst [vmem:[%s151 + $0xa8] sm:$0xff] %v194
                %v196 = vld [vmem:[%s150 + $0x150] sm:$0xff]
                %197 = vst [vmem:[%s151 + $0xb0] sm:$0xff] %v196
                %v198 = vld [vmem:[%s150 + $0x158] sm:$0xff]
                %199 = vst [vmem:[%s151 + $0xb8] sm:$0xff] %v198
                %v200 = vld [vmem:[%s150 + $0x180] sm:$0xff]
                %201 = vst [vmem:[%s151 + $0xc0] sm:$0xff] %v200
                %v202 = vld [vmem:[%s150 + $0x188] sm:$0xff]
                %203 = vst [vmem:[%s151 + $0xc8] sm:$0xff] %v202
                %v204 = vld [vmem:[%s150 + $0x190] sm:$0xff]
                %205 = vst [vmem:[%s151 + $0xd0] sm:$0xff] %v204
                %v206 = vld [vmem:[%s150 + $0x198] sm:$0xff]
                %207 = vst [vmem:[%s151 + $0xd8] sm:$0xff] %v206
                %v208 = vld [vmem:[%s150 + $0x1c0] sm:$0xff]
                %209 = vst [vmem:[%s151 + $0xe0] sm:$0xff] %v208
                %v210 = vld [vmem:[%s150 + $0x1c8] sm:$0xff]
                %211 = vst [vmem:[%s151 + $0xe8] sm:$0xff] %v210
                %v212 = vld [vmem:[%s150 + $0x1d0] sm:$0xff]
                %213 = vst [vmem:[%s151 + $0xf0] sm:$0xff] %v212
                %v214 = vld [vmem:[%s150 + $0x1d8] sm:$0xff]
                %215 = vst [vmem:[%s151 + $0xf8] sm:$0xff] %v214
                %v216 = vld [vmem:[%s150 + $0x200] sm:$0xff]
                %217 = vst [vmem:[%s151 + $0x100] sm:$0xff] %v216
                %v218 = vld [vmem:[%s150 + $0x208] sm:$0xff]
                %219 = vst [vmem:[%s151 + $0x108] sm:$0xff] %v218
                %v220 = vld [vmem:[%s150 + $0x210] sm:$0xff]
                %221 = vst [vmem:[%s151 + $0x110] sm:$0xff] %v220
                %v222 = vld [vmem:[%s150 + $0x218] sm:$0xff]
                %223 = vst [vmem:[%s151 + $0x118] sm:$0xff] %v222
                %v224 = vld [vmem:[%s150 + $0x240] sm:$0xff]
                %225 = vst [vmem:[%s151 + $0x120] sm:$0xff] %v224
                %v226 = vld [vmem:[%s150 + $0x248] sm:$0xff]
                %227 = vst [vmem:[%s151 + $0x128] sm:$0xff] %v226
                %v228 = vld [vmem:[%s150 + $0x250] sm:$0xff]
                %229 = vst [vmem:[%s151 + $0x130] sm:$0xff] %v228
                %v230 = vld [vmem:[%s150 + $0x258] sm:$0xff]
                %231 = vst [vmem:[%s151 + $0x138] sm:$0xff] %v230
                %v232 = vld [vmem:[%s150 + $0x280] sm:$0xff]
                %233 = vst [vmem:[%s151 + $0x140] sm:$0xff] %v232
                %v234 = vld [vmem:[%s150 + $0x288] sm:$0xff]
                %235 = vst [vmem:[%s151 + $0x148] sm:$0xff] %v234
                %v236 = vld [vmem:[%s150 + $0x290] sm:$0xff]
                %237 = vst [vmem:[%s151 + $0x150] sm:$0xff] %v236
                %v238 = vld [vmem:[%s150 + $0x298] sm:$0xff]
                %239 = vst [vmem:[%s151 + $0x158] sm:$0xff] %v238
                %v240 = vld [vmem:[%s150 + $0x2c0] sm:$0xff]
                %241 = vst [vmem:[%s151 + $0x160] sm:$0xff] %v240
                %v242 = vld [vmem:[%s150 + $0x2c8] sm:$0xff]
                %243 = vst [vmem:[%s151 + $0x168] sm:$0xff] %v242
                %v244 = vld [vmem:[%s150 + $0x2d0] sm:$0xff]
                %245 = vst [vmem:[%s151 + $0x170] sm:$0xff] %v244
                %v246 = vld [vmem:[%s150 + $0x2d8] sm:$0xff]
                %247 = vst [vmem:[%s151 + $0x178] sm:$0xff] %v246
                %v248 = vld [vmem:[%s150 + $0x300] sm:$0xff]
                %249 = vst [vmem:[%s151 + $0x180] sm:$0xff] %v248
                %v250 = vld [vmem:[%s150 + $0x308] sm:$0xff]
                %251 = vst [vmem:[%s151 + $0x188] sm:$0xff] %v250
                %v252 = vld [vmem:[%s150 + $0x310] sm:$0xff]
                %253 = vst [vmem:[%s151 + $0x190] sm:$0xff] %v252
                %v254 = vld [vmem:[%s150 + $0x318] sm:$0xff]
                %255 = vst [vmem:[%s151 + $0x198] sm:$0xff] %v254
                %v256 = vld [vmem:[%s150 + $0x340] sm:$0xff]
                %257 = vst [vmem:[%s151 + $0x1a0] sm:$0xff] %v256
                %v258 = vld [vmem:[%s150 + $0x348] sm:$0xff]
                %259 = vst [vmem:[%s151 + $0x1a8] sm:$0xff] %v258
                %v260 = vld [vmem:[%s150 + $0x350] sm:$0xff]
                %261 = vst [vmem:[%s151 + $0x1b0] sm:$0xff] %v260
                %v262 = vld [vmem:[%s150 + $0x358] sm:$0xff]
                %263 = vst [vmem:[%s151 + $0x1b8] sm:$0xff] %v262
                %v264 = vld [vmem:[%s150 + $0x380] sm:$0xff]
                %265 = vst [vmem:[%s151 + $0x1c0] sm:$0xff] %v264
                %v266 = vld [vmem:[%s150 + $0x388] sm:$0xff]
                %267 = vst [vmem:[%s151 + $0x1c8] sm:$0xff] %v266
                %v268 = vld [vmem:[%s150 + $0x390] sm:$0xff]
                %269 = vst [vmem:[%s151 + $0x1d0] sm:$0xff] %v268
                %v270 = vld [vmem:[%s150 + $0x398] sm:$0xff]
                %271 = vst [vmem:[%s151 + $0x1d8] sm:$0xff] %v270
                %v272 = vld [vmem:[%s150 + $0x3c0] sm:$0xff]
                %273 = vst [vmem:[%s151 + $0x1e0] sm:$0xff] %v272
                %v274 = vld [vmem:[%s150 + $0x3c8] sm:$0xff]
                %275 = vst [vmem:[%s151 + $0x1e8] sm:$0xff] %v274
                %v276 = vld [vmem:[%s150 + $0x3d0] sm:$0xff]
                %277 = vst [vmem:[%s151 + $0x1f0] sm:$0xff] %v276
                %v278 = vld [vmem:[%s150 + $0x3d8] sm:$0xff]
                %279 = vst [vmem:[%s151 + $0x1f8] sm:$0xff] %v278
              $region37: #{l2constrained_forward.4} parent=31 // loop_footer
                %s149 = sadd.s32 1, %s145
              $region38: #{l2constrained_forward.4} parent=31 // loop_footer_branch
                %144 = sbr.rel target = $region34
              $region39: #{l2constrained_forward.4} parent=31 // loop_exit
                _
            $region32: #{l2constrained_forward.4} parent=27 // pred_fallthru
              _
            // Predicated region
            $region40: #{l2constrained_forward.4} parent=27 // pred_check
              _
            $region41: #{l2constrained_forward.4} parent=27 // pred_check_branch
              %281 = sbr.rel target = $region43
            $region42: #{l2constrained_forward.4} parent=27 // pred_region
              _
            $region43: #{l2constrained_forward.4} parent=27 // pred_fallthru
              _
          $region28: #{l2constrained_forward.4} parent=23 // pred_fallthru
            _
          %282 = vnop
        $region24: #{l2constrained_forward.4} parent=19 // pred_fallthru
          _
        // Predicated region
        $region44: #{l2constrained_forward.4} parent=19 // pred_check
          %p283 = pneg %p76
        $region45: #{l2constrained_forward.4} parent=19 // pred_check_branch
          %285 = sbr.rel (%p283) target = $region47
        $region46: #{l2constrained_forward.4} parent=19 // pred_region
          %s286 = smul.u32 8, %s9
          %p287 = scmp.lt.s32.totalorder %s286, 15
          %s288 = scalar_select %p287, %s286, 15
          %s289 = scalar_lea.vmem %s2, %s288
          %s290 = smul.u32 8, %s9
        $region47: #{l2constrained_forward.4} parent=19 // pred_fallthru
          _
      $region20: #{l2constrained_forward.4} parent=5 // pred_fallthru
        _
      %p291 = scmp.le.s32.totalorder 1, %s9
      %p292 = scmp.lt.s32.totalorder %s9, 3
      %p293 = pnand %p291, %p292
      %p294 = pneg %p293
      // Predicated region
      $region48: #{l2constrained_forward.4} parent=5 // pred_check
        _
      $region49: #{l2constrained_forward.4} parent=5 // pred_check_branch
        %296 = sbr.rel (%p293) target = $region51
      $region50: #{l2constrained_forward.4} parent=5 // pred_region
        %s297 = ssub.s32 %s9, 1
        %s298 = sand.u32 %s43, 1
        %s299 = sand.u32 %s43, 1
        %s300 = smul.addr %s299, 512
        %s301 = scalar_lea.vmem [#allocation2], %s300
        // Predicated region
        $region52: #{l2constrained_forward.4} parent=50 // pred_check
          %p302 = pneg %p56
        $region53: #{l2constrained_forward.4} parent=50 // pred_check_branch
          %304 = sbr.rel (%p302) target = $region55
        $region54: #{l2constrained_forward.4} parent=50 // pred_region
          _
        $region55: #{l2constrained_forward.4} parent=50 // pred_fallthru
          _
        %p305 = pneg %p30
        %p306 = pneg %p27
        %s307 = sand.u32 %s43, 1
        %s308 = sand.u32 %s43, 1
        %s309 = smul.addr %s308, 512
        %s310 = scalar_lea.vmem [#allocation2], %s309
        %p311 = pneg %p56
        %p312 = pneg %p53
        %s313 = smul.u32 8, %s14
        %p314 = scmp.lt.s32.totalorder %s313, 15
        %s315 = scalar_select %p314, %s313, 15
        %s316 = scalar_lea.vmem %s2, %s315
        %p317 = pneg %p82
        %p318 = pneg %p79
        %p319 = pneg %p108
        %p320 = pneg %p105
        %s321 = smul.u32 8, %s14
        %p322 = scmp.lt.s32.totalorder %s321, 15
        %s323 = scalar_select %p322, %s321, 15
        %s324 = smul.addr %s323, 4
        %s325 = scalar_lea.vmem %s3, %s324
        %s326 = smul.u32 8, %s14
        %s327 = smul.u32 8, %s14
        %p328 = scmp.lt.s32.totalorder %s327, 15
        %s329 = scalar_select %p328, %s327, 15
        %s330 = scalar_lea.vmem %s2, %s329
        %s331 = smul.u32 8, %s14
        %s332 = smul.u32 8, %s14
        %p333 = scmp.lt.s32.totalorder %s332, 15
        %s334 = scalar_select %p333, %s332, 15
        %s335 = smul.addr %s334, 4
        %s336 = scalar_lea.vmem %s3, %s335
        %s337 = smul.u32 8, %s14
        %v339 = vld [vmem:[%s0] sm:$0xf]
        %v340 = vpack.c.bf16 %v339, %v339
        %v341 = vld [vmem:[%s301] sm:$0xff]
        %v342 = vld [vmem:[%s301 + $0x8] sm:$0xff]
        %v343 = vld [vmem:[%s301 + $0x10] sm:$0xff]
        %v344 = vld [vmem:[%s301 + $0x18] sm:$0xff]
        %v345 = vld [vmem:[%s301 + $0x20] sm:$0xff]
        %v346 = vld [vmem:[%s301 + $0x28] sm:$0xff]
        %v347 = vld [vmem:[%s301 + $0x30] sm:$0xff]
        %v348 = vld [vmem:[%s301 + $0x38] sm:$0xff]
        %v349 = vld [vmem:[%s301 + $0x40] sm:$0xff]
        %v350 = vld [vmem:[%s301 + $0x48] sm:$0xff]
        %v351 = vld [vmem:[%s301 + $0x50] sm:$0xff]
        %v352 = vld [vmem:[%s301 + $0x58] sm:$0xff]
        %v353 = vld [vmem:[%s301 + $0x60] sm:$0xff]
        %v354 = vld [vmem:[%s301 + $0x68] sm:$0xff]
        %v355 = vld [vmem:[%s301 + $0x70] sm:$0xff]
        %v356 = vld [vmem:[%s301 + $0x78] sm:$0xff]
        %v357 = vld [vmem:[%s301 + $0x80] sm:$0xff]
        %v358 = vld [vmem:[%s301 + $0x88] sm:$0xff]
        %v359 = vld [vmem:[%s301 + $0x90] sm:$0xff]
        %v360 = vld [vmem:[%s301 + $0x98] sm:$0xff]
        %v361 = vld [vmem:[%s301 + $0xa0] sm:$0xff]
        %v362 = vld [vmem:[%s301 + $0xa8] sm:$0xff]
        %v363 = vld [vmem:[%s301 + $0xb0] sm:$0xff]
        %v364 = vld [vmem:[%s301 + $0xb8] sm:$0xff]
        %v365 = vld [vmem:[%s301 + $0xc0] sm:$0xff]
        %v366 = vld [vmem:[%s301 + $0xc8] sm:$0xff]
        %v367 = vld [vmem:[%s301 + $0xd0] sm:$0xff]
        %v368 = vld [vmem:[%s301 + $0xd8] sm:$0xff]
        %v369 = vld [vmem:[%s301 + $0xe0] sm:$0xff]
        %v370 = vld [vmem:[%s301 + $0xe8] sm:$0xff]
        %v371 = vld [vmem:[%s301 + $0xf0] sm:$0xff]
        %v372 = vld [vmem:[%s301 + $0xf8] sm:$0xff]
        %v373 = vld [vmem:[%s301 + $0x100] sm:$0xff]
        %v374 = vld [vmem:[%s301 + $0x108] sm:$0xff]
        %v375 = vld [vmem:[%s301 + $0x110] sm:$0xff]
        %v376 = vld [vmem:[%s301 + $0x118] sm:$0xff]
        %v377 = vld [vmem:[%s301 + $0x120] sm:$0xff]
        %v378 = vld [vmem:[%s301 + $0x128] sm:$0xff]
        %v379 = vld [vmem:[%s301 + $0x130] sm:$0xff]
        %v380 = vld [vmem:[%s301 + $0x138] sm:$0xff]
        %v381 = vld [vmem:[%s301 + $0x140] sm:$0xff]
        %v382 = vld [vmem:[%s301 + $0x148] sm:$0xff]
        %v383 = vld [vmem:[%s301 + $0x150] sm:$0xff]
        %v384 = vld [vmem:[%s301 + $0x158] sm:$0xff]
        %v385 = vld [vmem:[%s301 + $0x160] sm:$0xff]
        %v386 = vld [vmem:[%s301 + $0x168] sm:$0xff]
        %v387 = vld [vmem:[%s301 + $0x170] sm:$0xff]
        %v388 = vld [vmem:[%s301 + $0x178] sm:$0xff]
        %v389 = vld [vmem:[%s301 + $0x180] sm:$0xff]
        %v390 = vld [vmem:[%s301 + $0x188] sm:$0xff]
        %v391 = vld [vmem:[%s301 + $0x190] sm:$0xff]
        %v392 = vld [vmem:[%s301 + $0x198] sm:$0xff]
        %v393 = vld [vmem:[%s301 + $0x1a0] sm:$0xff]
        %v394 = vld [vmem:[%s301 + $0x1a8] sm:$0xff]
        %v395 = vld [vmem:[%s301 + $0x1b0] sm:$0xff]
        %v396 = vld [vmem:[%s301 + $0x1b8] sm:$0xff]
        %v397 = vld [vmem:[%s301 + $0x1c0] sm:$0xff]
        %v398 = vld [vmem:[%s301 + $0x1c8] sm:$0xff]
        %v399 = vld [vmem:[%s301 + $0x1d0] sm:$0xff]
        %v400 = vld [vmem:[%s301 + $0x1d8] sm:$0xff]
        %v401 = vld [vmem:[%s301 + $0x1e0] sm:$0xff]
        %v402 = vld [vmem:[%s301 + $0x1e8] sm:$0xff]
        %v403 = vld [vmem:[%s301 + $0x1f0] sm:$0xff]
        %v404 = vld [vmem:[%s301 + $0x1f8] sm:$0xff]
        %v405 = vld [vmem:[%s330] sm:$0xff]
        %v407 = vlaneseq
        %v408 = vshrl.u32 %v407, 7
        %v409 = vsub.s32 0, %v408
        %v410 = vrot.slane %v405, %v409
        %v411 = vlaneseq
        %v412 = vshrl.u32 %v411, 7
        %v413 = vsub.s32 1, %v412
        %v414 = vrot.slane %v405, %v413
        %v415 = vlaneseq
        %v416 = vshrl.u32 %v415, 7
        %v417 = vsub.s32 2, %v416
        %v418 = vrot.slane %v405, %v417
        %v419 = vlaneseq
        %v420 = vshrl.u32 %v419, 7
        %v421 = vsub.s32 3, %v420
        %v422 = vrot.slane %v405, %v421
        %v423 = vlaneseq
        %v424 = vshrl.u32 %v423, 7
        %v425 = vsub.s32 4, %v424
        %v426 = vrot.slane %v405, %v425
        %v427 = vlaneseq
        %v428 = vshrl.u32 %v427, 7
        %v429 = vsub.s32 5, %v428
        %v430 = vrot.slane %v405, %v429
        %v431 = vlaneseq
        %v432 = vshrl.u32 %v431, 7
        %v433 = vsub.s32 6, %v432
        %v434 = vrot.slane %v405, %v433
        %v435 = vlaneseq
        %v436 = vshrl.u32 %v435, 7
        %v437 = vsub.s32 7, %v436
        %v438 = vrot.slane %v405, %v437
        %v511 = vunpack.c.l.b16 %v341
        %v512 = vunpack.c.h.b16 %v341
        %v513 = vunpack.c.l.b16 %v342
        %v514 = vunpack.c.h.b16 %v342
        %v515 = vunpack.c.l.b16 %v343
        %v516 = vunpack.c.h.b16 %v343
        %v517 = vunpack.c.l.b16 %v344
        %v518 = vunpack.c.h.b16 %v344
        %v519 = vunpack.c.l.b16 %v345
        %v520 = vunpack.c.h.b16 %v345
        %v521 = vunpack.c.l.b16 %v346
        %v522 = vunpack.c.h.b16 %v346
        %v523 = vunpack.c.l.b16 %v347
        %v524 = vunpack.c.h.b16 %v347
        %v525 = vunpack.c.l.b16 %v348
        %v526 = vunpack.c.h.b16 %v348
        %v527 = vunpack.c.l.b16 %v349
        %v528 = vunpack.c.h.b16 %v349
        %v529 = vunpack.c.l.b16 %v350
        %v530 = vunpack.c.h.b16 %v350
        %v531 = vunpack.c.l.b16 %v351
        %v532 = vunpack.c.h.b16 %v351
        %v533 = vunpack.c.l.b16 %v352
        %v534 = vunpack.c.h.b16 %v352
        %v535 = vunpack.c.l.b16 %v353
        %v536 = vunpack.c.h.b16 %v353
        %v537 = vunpack.c.l.b16 %v354
        %v538 = vunpack.c.h.b16 %v354
        %v539 = vunpack.c.l.b16 %v355
        %v540 = vunpack.c.h.b16 %v355
        %v541 = vunpack.c.l.b16 %v356
        %v542 = vunpack.c.h.b16 %v356
        %v543 = vunpack.c.l.b16 %v357
        %v544 = vunpack.c.h.b16 %v357
        %v545 = vunpack.c.l.b16 %v358
        %v546 = vunpack.c.h.b16 %v358
        %v547 = vunpack.c.l.b16 %v359
        %v548 = vunpack.c.h.b16 %v359
        %v549 = vunpack.c.l.b16 %v360
        %v550 = vunpack.c.h.b16 %v360
        %v551 = vunpack.c.l.b16 %v361
        %v552 = vunpack.c.h.b16 %v361
        %v553 = vunpack.c.l.b16 %v362
        %v554 = vunpack.c.h.b16 %v362
        %v555 = vunpack.c.l.b16 %v363
        %v556 = vunpack.c.h.b16 %v363
        %v557 = vunpack.c.l.b16 %v364
        %v558 = vunpack.c.h.b16 %v364
        %v559 = vunpack.c.l.b16 %v365
        %v560 = vunpack.c.h.b16 %v365
        %v561 = vunpack.c.l.b16 %v366
        %v562 = vunpack.c.h.b16 %v366
        %v563 = vunpack.c.l.b16 %v367
        %v564 = vunpack.c.h.b16 %v367
        %v565 = vunpack.c.l.b16 %v368
        %v566 = vunpack.c.h.b16 %v368
        %v567 = vunpack.c.l.b16 %v369
        %v568 = vunpack.c.h.b16 %v369
        %v569 = vunpack.c.l.b16 %v370
        %v570 = vunpack.c.h.b16 %v370
        %v571 = vunpack.c.l.b16 %v371
        %v572 = vunpack.c.h.b16 %v371
        %v573 = vunpack.c.l.b16 %v372
        %v574 = vunpack.c.h.b16 %v372
        %v575 = vunpack.c.l.b16 %v373
        %v576 = vunpack.c.h.b16 %v373
        %v577 = vunpack.c.l.b16 %v374
        %v578 = vunpack.c.h.b16 %v374
        %v579 = vunpack.c.l.b16 %v375
        %v580 = vunpack.c.h.b16 %v375
        %v581 = vunpack.c.l.b16 %v376
        %v582 = vunpack.c.h.b16 %v376
        %v583 = vunpack.c.l.b16 %v377
        %v584 = vunpack.c.h.b16 %v377
        %v585 = vunpack.c.l.b16 %v378
        %v586 = vunpack.c.h.b16 %v378
        %v587 = vunpack.c.l.b16 %v379
        %v588 = vunpack.c.h.b16 %v379
        %v589 = vunpack.c.l.b16 %v380
        %v590 = vunpack.c.h.b16 %v380
        %v591 = vunpack.c.l.b16 %v381
        %v592 = vunpack.c.h.b16 %v381
        %v593 = vunpack.c.l.b16 %v382
        %v594 = vunpack.c.h.b16 %v382
        %v595 = vunpack.c.l.b16 %v383
        %v596 = vunpack.c.h.b16 %v383
        %v597 = vunpack.c.l.b16 %v384
        %v598 = vunpack.c.h.b16 %v384
        %v599 = vunpack.c.l.b16 %v385
        %v600 = vunpack.c.h.b16 %v385
        %v601 = vunpack.c.l.b16 %v386
        %v602 = vunpack.c.h.b16 %v386
        %v603 = vunpack.c.l.b16 %v387
        %v604 = vunpack.c.h.b16 %v387
        %v605 = vunpack.c.l.b16 %v388
        %v606 = vunpack.c.h.b16 %v388
        %v607 = vunpack.c.l.b16 %v389
        %v608 = vunpack.c.h.b16 %v389
        %v609 = vunpack.c.l.b16 %v390
        %v610 = vunpack.c.h.b16 %v390
        %v611 = vunpack.c.l.b16 %v391
        %v612 = vunpack.c.h.b16 %v391
        %v613 = vunpack.c.l.b16 %v392
        %v614 = vunpack.c.h.b16 %v392
        %v615 = vunpack.c.l.b16 %v393
        %v616 = vunpack.c.h.b16 %v393
        %v617 = vunpack.c.l.b16 %v394
        %v618 = vunpack.c.h.b16 %v394
        %v619 = vunpack.c.l.b16 %v395
        %v620 = vunpack.c.h.b16 %v395
        %v621 = vunpack.c.l.b16 %v396
        %v622 = vunpack.c.h.b16 %v396
        %v623 = vunpack.c.l.b16 %v397
        %v624 = vunpack.c.h.b16 %v397
        %v625 = vunpack.c.l.b16 %v398
        %v626 = vunpack.c.h.b16 %v398
        %v627 = vunpack.c.l.b16 %v399
        %v628 = vunpack.c.h.b16 %v399
        %v629 = vunpack.c.l.b16 %v400
        %v630 = vunpack.c.h.b16 %v400
        %v631 = vunpack.c.l.b16 %v401
        %v632 = vunpack.c.h.b16 %v401
        %v633 = vunpack.c.l.b16 %v402
        %v634 = vunpack.c.h.b16 %v402
        %v635 = vunpack.c.l.b16 %v403
        %v636 = vunpack.c.h.b16 %v403
        %v637 = vunpack.c.l.b16 %v404
        %v638 = vunpack.c.h.b16 %v404
        %v639 = vpack.c.b16 %v519, %v511
        %v640 = vpack.c.b16 %v520, %v512
        %v641 = vpack.c.b16 %v521, %v513
        %v642 = vpack.c.b16 %v522, %v514
        %v643 = vpack.c.b16 %v523, %v515
        %v644 = vpack.c.b16 %v524, %v516
        %v645 = vpack.c.b16 %v525, %v517
        %v646 = vpack.c.b16 %v526, %v518
        %v647 = vpack.c.b16 %v535, %v527
        %v648 = vpack.c.b16 %v536, %v528
        %v649 = vpack.c.b16 %v537, %v529
        %v650 = vpack.c.b16 %v538, %v530
        %v651 = vpack.c.b16 %v539, %v531
        %v652 = vpack.c.b16 %v540, %v532
        %v653 = vpack.c.b16 %v541, %v533
        %v654 = vpack.c.b16 %v542, %v534
        %v655 = vpack.c.b16 %v551, %v543
        %v656 = vpack.c.b16 %v552, %v544
        %v657 = vpack.c.b16 %v553, %v545
        %v658 = vpack.c.b16 %v554, %v546
        %v659 = vpack.c.b16 %v555, %v547
        %v660 = vpack.c.b16 %v556, %v548
        %v661 = vpack.c.b16 %v557, %v549
        %v662 = vpack.c.b16 %v558, %v550
        %v663 = vpack.c.b16 %v567, %v559
        %v664 = vpack.c.b16 %v568, %v560
        %v665 = vpack.c.b16 %v569, %v561
        %v666 = vpack.c.b16 %v570, %v562
        %v667 = vpack.c.b16 %v571, %v563
        %v668 = vpack.c.b16 %v572, %v564
        %v669 = vpack.c.b16 %v573, %v565
        %v670 = vpack.c.b16 %v574, %v566
        %v671 = vpack.c.b16 %v583, %v575
        %v672 = vpack.c.b16 %v584, %v576
        %v673 = vpack.c.b16 %v585, %v577
        %v674 = vpack.c.b16 %v586, %v578
        %v675 = vpack.c.b16 %v587, %v579
        %v676 = vpack.c.b16 %v588, %v580
        %v677 = vpack.c.b16 %v589, %v581
        %v678 = vpack.c.b16 %v590, %v582
        %v679 = vpack.c.b16 %v599, %v591
        %v680 = vpack.c.b16 %v600, %v592
        %v681 = vpack.c.b16 %v601, %v593
        %v682 = vpack.c.b16 %v602, %v594
        %v683 = vpack.c.b16 %v603, %v595
        %v684 = vpack.c.b16 %v604, %v596
        %v685 = vpack.c.b16 %v605, %v597
        %v686 = vpack.c.b16 %v606, %v598
        %v687 = vpack.c.b16 %v615, %v607
        %v688 = vpack.c.b16 %v616, %v608
        %v689 = vpack.c.b16 %v617, %v609
        %v690 = vpack.c.b16 %v618, %v610
        %v691 = vpack.c.b16 %v619, %v611
        %v692 = vpack.c.b16 %v620, %v612
        %v693 = vpack.c.b16 %v621, %v613
        %v694 = vpack.c.b16 %v622, %v614
        %v695 = vpack.c.b16 %v631, %v623
        %v696 = vpack.c.b16 %v632, %v624
        %v697 = vpack.c.b16 %v633, %v625
        %v698 = vpack.c.b16 %v634, %v626
        %v699 = vpack.c.b16 %v635, %v627
        %v700 = vpack.c.b16 %v636, %v628
        %v701 = vpack.c.b16 %v637, %v629
        %v702 = vpack.c.b16 %v638, %v630
        %767 = vmatprep.subr.bf16.mxu0 %v640
        %768 = vmatpush1.bf16.msra.mxu0 %v639
        %769 = vmatprep.subr.bf16.mxu0 %v648
        %770 = vmatpush1.bf16.msra.mxu0 %v647
        %771 = vmatprep.subr.bf16.mxu0 %v656
        %772 = vmatpush1.bf16.msra.mxu0 %v655
        %773 = vmatprep.subr.bf16.mxu0 %v664
        %774 = vmatpush1.bf16.msra.mxu0 %v663
        %775 = vmatprep.subr.bf16.mxu0 %v672
        %776 = vmatpush1.bf16.msra.mxu0 %v671
        %777 = vmatprep.subr.bf16.mxu0 %v680
        %778 = vmatpush1.bf16.msra.mxu0 %v679
        %779 = vmatprep.subr.bf16.mxu0 %v688
        %780 = vmatpush1.bf16.msra.mxu0 %v687
        %781 = vmatprep.subr.bf16.mxu0 %v696
        %782 = vmatpush1.bf16.msra.mxu0 %v695
        %783 = vmatprep.subr.bf16.mxu0 0
        %784 = vmatpush1.bf16.msra.mxu0 0
        %785 = vmatprep.subr.bf16.mxu0 0
        %786 = vmatpush1.bf16.msra.mxu0 0
        %787 = vmatprep.subr.bf16.mxu0 0
        %788 = vmatpush1.bf16.msra.mxu0 0
        %789 = vmatprep.subr.bf16.mxu0 0
        %790 = vmatpush1.bf16.msra.mxu0 0
        %791 = vmatprep.subr.bf16.mxu0 0
        %792 = vmatpush1.bf16.msra.mxu0 0
        %793 = vmatprep.subr.bf16.mxu0 0
        %794 = vmatpush1.bf16.msra.mxu0 0
        %795 = vmatprep.subr.bf16.mxu0 0
        %796 = vmatpush1.bf16.msra.mxu0 0
        %797 = vmatprep.subr.bf16.mxu0 0
        %798 = vmatpush1.bf16.msra.mxu0 0
        %799 = vmatprep.mubr.bf16.mxu0 0
        %800 = vmatmul.mubr.bf16.gmra.mrb[0].mxu0 %v340
        %v801 = vpop.f32.mrb[0].mxu0
        %v802 = vadd.f32 %v410, %v801
        %v803 = vpop.f32.mrb[0].mxu0
        %v804 = vadd.f32 %v414, %v803
        %v805 = vpop.f32.mrb[0].mxu0
        %v806 = vpop.f32.mrb[0].mxu0
        %807 = vdwg.mxu0
        %808 = vmatprep.subr.bf16.mxu0 %v642
        %809 = vmatpush1.bf16.msra.mxu0 %v641
        %810 = vmatprep.subr.bf16.mxu0 %v650
        %811 = vmatpush1.bf16.msra.mxu0 %v649
        %812 = vmatprep.subr.bf16.mxu0 %v658
        %813 = vmatpush1.bf16.msra.mxu0 %v657
        %814 = vmatprep.subr.bf16.mxu0 %v666
        %815 = vmatpush1.bf16.msra.mxu0 %v665
        %816 = vmatprep.subr.bf16.mxu0 %v674
        %817 = vmatpush1.bf16.msra.mxu0 %v673
        %818 = vmatprep.subr.bf16.mxu0 %v682
        %819 = vmatpush1.bf16.msra.mxu0 %v681
        %820 = vmatprep.subr.bf16.mxu0 %v690
        %821 = vmatpush1.bf16.msra.mxu0 %v689
        %822 = vmatprep.subr.bf16.mxu0 %v698
        %823 = vmatpush1.bf16.msra.mxu0 %v697
        %824 = vmatprep.subr.bf16.mxu0 0
        %825 = vmatpush1.bf16.msra.mxu0 0
        %826 = vmatprep.subr.bf16.mxu0 0
        %827 = vmatpush1.bf16.msra.mxu0 0
        %828 = vmatprep.subr.bf16.mxu0 0
        %829 = vmatpush1.bf16.msra.mxu0 0
        %830 = vmatprep.subr.bf16.mxu0 0
        %831 = vmatpush1.bf16.msra.mxu0 0
        %832 = vmatprep.subr.bf16.mxu0 0
        %833 = vmatpush1.bf16.msra.mxu0 0
        %834 = vmatprep.subr.bf16.mxu0 0
        %835 = vmatpush1.bf16.msra.mxu0 0
        %836 = vmatprep.subr.bf16.mxu0 0
        %837 = vmatpush1.bf16.msra.mxu0 0
        %838 = vmatprep.subr.bf16.mxu0 0
        %839 = vmatpush1.bf16.msra.mxu0 0
        %840 = vmatprep.mubr.bf16.mxu0 0
        %841 = vmatmul.mubr.bf16.gmra.mrb[0].mxu0 %v340
        %v842 = vpop.f32.mrb[0].mxu0
        %v843 = vadd.f32 %v418, %v842
        %v844 = vpop.f32.mrb[0].mxu0
        %v845 = vadd.f32 %v422, %v844
        %v846 = vpop.f32.mrb[0].mxu0
        %v847 = vpop.f32.mrb[0].mxu0
        %848 = vdwg.mxu0
        %849 = vmatprep.subr.bf16.mxu0 %v644
        %850 = vmatpush1.bf16.msra.mxu0 %v643
        %851 = vmatprep.subr.bf16.mxu0 %v652
        %852 = vmatpush1.bf16.msra.mxu0 %v651
        %853 = vmatprep.subr.bf16.mxu0 %v660
        %854 = vmatpush1.bf16.msra.mxu0 %v659
        %855 = vmatprep.subr.bf16.mxu0 %v668
        %856 = vmatpush1.bf16.msra.mxu0 %v667
        %857 = vmatprep.subr.bf16.mxu0 %v676
        %858 = vmatpush1.bf16.msra.mxu0 %v675
        %859 = vmatprep.subr.bf16.mxu0 %v684
        %860 = vmatpush1.bf16.msra.mxu0 %v683
        %861 = vmatprep.subr.bf16.mxu0 %v692
        %862 = vmatpush1.bf16.msra.mxu0 %v691
        %863 = vmatprep.subr.bf16.mxu0 %v700
        %864 = vmatpush1.bf16.msra.mxu0 %v699
        %865 = vmatprep.subr.bf16.mxu0 0
        %866 = vmatpush1.bf16.msra.mxu0 0
        %867 = vmatprep.subr.bf16.mxu0 0
        %868 = vmatpush1.bf16.msra.mxu0 0
        %869 = vmatprep.subr.bf16.mxu0 0
        %870 = vmatpush1.bf16.msra.mxu0 0
        %871 = vmatprep.subr.bf16.mxu0 0
        %872 = vmatpush1.bf16.msra.mxu0 0
        %873 = vmatprep.subr.bf16.mxu0 0
        %874 = vmatpush1.bf16.msra.mxu0 0
        %875 = vmatprep.subr.bf16.mxu0 0
        %876 = vmatpush1.bf16.msra.mxu0 0
        %877 = vmatprep.subr.bf16.mxu0 0
        %878 = vmatpush1.bf16.msra.mxu0 0
        %879 = vmatprep.subr.bf16.mxu0 0
        %880 = vmatpush1.bf16.msra.mxu0 0
        %881 = vmatprep.mubr.bf16.mxu0 0
        %882 = vmatmul.mubr.bf16.gmra.mrb[0].mxu0 %v340
        %v883 = vpop.f32.mrb[0].mxu0
        %v884 = vadd.f32 %v426, %v883
        %v885 = vpop.f32.mrb[0].mxu0
        %v886 = vadd.f32 %v430, %v885
        %v887 = vpop.f32.mrb[0].mxu0
        %v888 = vpop.f32.mrb[0].mxu0
        %889 = vdwg.mxu0
        %890 = vmatprep.subr.bf16.mxu0 %v646
        %891 = vmatpush1.bf16.msra.mxu0 %v645
        %892 = vmatprep.subr.bf16.mxu0 %v654
        %893 = vmatpush1.bf16.msra.mxu0 %v653
        %894 = vmatprep.subr.bf16.mxu0 %v662
        %895 = vmatpush1.bf16.msra.mxu0 %v661
        %896 = vmatprep.subr.bf16.mxu0 %v670
        %897 = vmatpush1.bf16.msra.mxu0 %v669
        %898 = vmatprep.subr.bf16.mxu0 %v678
        %899 = vmatpush1.bf16.msra.mxu0 %v677
        %900 = vmatprep.subr.bf16.mxu0 %v686
        %901 = vmatpush1.bf16.msra.mxu0 %v685
        %902 = vmatprep.subr.bf16.mxu0 %v694
        %903 = vmatpush1.bf16.msra.mxu0 %v693
        %904 = vmatprep.subr.bf16.mxu0 %v702
        %905 = vmatpush1.bf16.msra.mxu0 %v701
        %906 = vmatprep.subr.bf16.mxu0 0
        %907 = vmatpush1.bf16.msra.mxu0 0
        %908 = vmatprep.subr.bf16.mxu0 0
        %909 = vmatpush1.bf16.msra.mxu0 0
        %910 = vmatprep.subr.bf16.mxu0 0
        %911 = vmatpush1.bf16.msra.mxu0 0
        %912 = vmatprep.subr.bf16.mxu0 0
        %913 = vmatpush1.bf16.msra.mxu0 0
        %914 = vmatprep.subr.bf16.mxu0 0
        %915 = vmatpush1.bf16.msra.mxu0 0
        %916 = vmatprep.subr.bf16.mxu0 0
        %917 = vmatpush1.bf16.msra.mxu0 0
        %918 = vmatprep.subr.bf16.mxu0 0
        %919 = vmatpush1.bf16.msra.mxu0 0
        %920 = vmatprep.subr.bf16.mxu0 0
        %921 = vmatpush1.bf16.msra.mxu0 0
        %922 = vmatprep.mubr.bf16.mxu0 0
        %923 = vmatmul.mubr.bf16.gmra.mrb[0].mxu0 %v340
        %v924 = vpop.f32.mrb[0].mxu0
        %v925 = vadd.f32 %v434, %v924
        %v926 = vpop.f32.mrb[0].mxu0
        %v927 = vadd.f32 %v438, %v926
        %v928 = vpop.f32.mrb[0].mxu0
        %v929 = vpop.f32.mrb[0].mxu0
        %930 = vdwg.mxu0
        %v939 = vcombine.low %v802, %v804
        %v940 = vcombine.low %v843, %v845
        %v941 = vcombine.low %v884, %v886
        %v942 = vcombine.low %v925, %v927
        %947 = vst [vmem:[%s336] sm:$0xff] %v939
        %948 = vst [vmem:[%s336 + $0x8] sm:$0xff] %v940
        %949 = vst [vmem:[%s336 + $0x10] sm:$0xff] %v941
        %950 = vst [vmem:[%s336 + $0x18] sm:$0xff] %v942
        %s951 = smul.u32 8, %s14
        %p952 = scmp.lt.s32.totalorder %s951, 15
        %s953 = scalar_select %p952, %s951, 15
        %s954 = smul.addr %s953, 4
        %s955 = scalar_lea.vmem %s3, %s954
        // Predicated region
        $region56: #{l2constrained_forward.4} parent=50 // pred_check
          %p956 = pneg %p105
        $region57: #{l2constrained_forward.4} parent=50 // pred_check_branch
          %958 = sbr.rel (%p956) target = $region59
        $region58: #{l2constrained_forward.4} parent=50 // pred_region
          %s959 = smul.u32 8, %s14
        $region59: #{l2constrained_forward.4} parent=50 // pred_fallthru
          _
      $region51: #{l2constrained_forward.4} parent=5 // pred_fallthru
        _
      %p960 = scmp.le.s32.totalorder 2, %s9
      // Predicated region
      $region60: #{l2constrained_forward.4} parent=5 // pred_check
        %p961 = pneg %p960
      $region61: #{l2constrained_forward.4} parent=5 // pred_check_branch
        %963 = sbr.rel (%p961) target = $region63
      $region62: #{l2constrained_forward.4} parent=5 // pred_region
        %s964 = ssub.s32 %s9, 2
        // Predicated region
        $region64: #{l2constrained_forward.4} parent=62 // pred_check
          %p965 = pneg %p111
        $region65: #{l2constrained_forward.4} parent=62 // pred_check_branch
          %967 = sbr.rel (%p965) target = $region67
        $region66: #{l2constrained_forward.4} parent=62 // pred_region
          %s968 = smul.u32 8, %s15
          %p969 = scmp.lt.s32.totalorder %s968, 15
          %s970 = scalar_select %p969, %s968, 15
          %s971 = smul.addr %s970, 4
          %s972 = scalar_lea.vmem %s3, %s971
        $region67: #{l2constrained_forward.4} parent=62 // pred_fallthru
          _
      $region63: #{l2constrained_forward.4} parent=5 // pred_fallthru
        _
    $region6: #{l2constrained_forward.4} parent=1 // loop_footer
      %s13 = sadd.s32 1, %s9
    $region7: #{l2constrained_forward.4} parent=1 // loop_footer_branch
      %8 = sbr.rel target = $region3
    $region8: #{l2constrained_forward.4} parent=1 // loop_exit
      _

// kernel: l2constrained_forward.3
$region0: #{l2constrained_forward.3}
  #allocation0 [shape = 'u32[]', space=smem, size = 0x4, offset = 0x4, fixed_abs, tag = 'smem constant byte address 0x4 - core index']
  #allocation1 [shape = 'u32[144,128]{1,0:T(1,128)}', space=vmem, size = 0x12000, scoped, tag = 'internal scratch']
  #allocation2 [shape = 'f32[4,128]{1,0:T(4,128)}', space=vmem, size = 0x800, scoped, tag = 'scratch operand']
  %s0 = inlined_call_operand.vmem [shape: f32[4,4608], index: 0, kind: input, shape index: {}]
  %s1 = inlined_call_operand.vmem [shape: f32[4,4608], index: 1, kind: input, shape index: {}]
  %s2 = inlined_call_operand.vmem [shape: bf16[4608,128], index: 2, kind: input, shape index: {}]
  %s3 = inlined_call_operand.vmem [shape: f32[4,128], index: 3, kind: output, shape index: {}]
  %s4 = sld [smem:[#allocation0]]
  $region53: #{l2constrained_forward.3} parent=0
    _
  %s6 = ssub.s32 1, %s4
  %s7 = scalar_select 0, %s6, %s4
  loop: start=0, step=1, limit=4
  $region2: #{l2constrained_forward.3} parent=0 // loop_pre_header
    _
  $region3: #{l2constrained_forward.3} parent=0 // loop_header
    %s9 = sphi 0, %s13
    %p10 = scmp.ge.s32.totalorder %s9, 4
    %s19 = sphi 0, %s21
    %s22 = sphi 0, %s19
    %s23 = sphi 0, %s22
    %s39 = sphi 0, %s23
    %s45 = sphi 0, %s47
    %s48 = sphi 0, %s45
    %s49 = sphi 0, %s48
    %s65 = sphi 0, %s49
    %s71 = sphi 0, %s73
    %s74 = sphi 0, %s71
    %s75 = sphi 0, %s74
    %s91 = sphi 0, %s75
    %s95 = sphi 0, %s95
    %s97 = sphi 0, %s95
    %s98 = sphi 0, %s97
    %s112 = sphi 0, %s98
  $region4: #{l2constrained_forward.3} parent=0 // loop_header_branch
    %12 = sbr.rel (%p10) target = $region8
  $region5: #{l2constrained_forward.3} parent=0 // loop_body
    %s14 = ssub.s32 %s9, 1
    %s15 = ssub.s32 %s9, 2
    %s16 = sadd.s32 %s9, 1
    %s17 = ssub.s32 %s9, %s16
    %p18 = scmp.eq.s32.totalorder %s17, 0
    %s20 = sadd.s32 %s19, 1
    %s21 = scalar_select %p18, %s19, %s20
    %p24 = pneg %p18
    %p25 = scmp.eq.s32.totalorder %s9, 1
    %p26 = por %p24, %p25
    %p27 = scmp.ne.s32.totalorder %s19, %s22
    %p28 = scmp.eq.s32.totalorder %s9, 0
    %p29 = por %p27, %p28
    %p30 = scmp.ne.s32.totalorder %s19, %s22
    %p31 = scmp.eq.s32.totalorder %s14, 1
    %p32 = por %p30, %p31
    %p33 = scmp.ne.s32.totalorder %s22, %s23
    %p34 = scmp.eq.s32.totalorder %s14, 0
    %p35 = por %p33, %p34
    %p36 = scmp.ne.s32.totalorder %s22, %s23
    %p37 = scmp.eq.s32.totalorder %s15, 1
    %p38 = por %p36, %p37
    %p40 = scmp.ne.s32.totalorder %s23, %s39
    %p41 = scmp.eq.s32.totalorder %s15, 0
    %p42 = por %p40, %p41
    %s43 = ssub.s32 %s9, %s16
    %p44 = scmp.eq.s32.totalorder %s43, 0
    %s46 = sadd.s32 %s45, 1
    %s47 = scalar_select %p44, %s45, %s46
    %p50 = pneg %p44
    %p51 = scmp.eq.s32.totalorder %s9, 1
    %p52 = por %p50, %p51
    %p53 = scmp.ne.s32.totalorder %s45, %s48
    %p54 = scmp.eq.s32.totalorder %s9, 0
    %p55 = por %p53, %p54
    %p56 = scmp.ne.s32.totalorder %s45, %s48
    %p57 = scmp.eq.s32.totalorder %s14, 1
    %p58 = por %p56, %p57
    %p59 = scmp.ne.s32.totalorder %s48, %s49
    %p60 = scmp.eq.s32.totalorder %s14, 0
    %p61 = por %p59, %p60
    %p62 = scmp.ne.s32.totalorder %s48, %s49
    %p63 = scmp.eq.s32.totalorder %s15, 1
    %p64 = por %p62, %p63
    %p66 = scmp.ne.s32.totalorder %s49, %s65
    %p67 = scmp.eq.s32.totalorder %s15, 0
    %p68 = por %p66, %p67
    %s69 = ssub.s32 %s9, %s16
    %p70 = scmp.eq.s32.totalorder %s69, 0
    %s72 = sadd.s32 %s71, 1
    %s73 = scalar_select %p70, %s71, %s72
    %p76 = pneg %p70
    %p77 = scmp.eq.s32.totalorder %s9, 1
    %p78 = por %p76, %p77
    %p79 = scmp.ne.s32.totalorder %s71, %s74
    %p80 = scmp.eq.s32.totalorder %s9, 0
    %p81 = por %p79, %p80
    %p82 = scmp.ne.s32.totalorder %s71, %s74
    %p83 = scmp.eq.s32.totalorder %s14, 1
    %p84 = por %p82, %p83
    %p85 = scmp.ne.s32.totalorder %s74, %s75
    %p86 = scmp.eq.s32.totalorder %s14, 0
    %p87 = por %p85, %p86
    %p88 = scmp.ne.s32.totalorder %s74, %s75
    %p89 = scmp.eq.s32.totalorder %s15, 1
    %p90 = por %p88, %p89
    %p92 = scmp.ne.s32.totalorder %s75, %s91
    %p93 = scmp.eq.s32.totalorder %s15, 0
    %p94 = por %p92, %p93
    %s96 = sadd.s32 %s95, 1
    %p99 = scmp.eq.s32.totalorder %s9, 1
    %p100 = scmp.ne.s32.totalorder %s95, %s97
    %p101 = scmp.eq.s32.totalorder %s9, 0
    %p102 = por %p100, %p101
    %p103 = scmp.ne.s32.totalorder %s95, %s97
    %p104 = scmp.eq.s32.totalorder %s14, 1
    %p105 = por %p103, %p104
    %p106 = scmp.ne.s32.totalorder %s97, %s98
    %p107 = scmp.eq.s32.totalorder %s14, 0
    %p108 = por %p106, %p107
    %p109 = scmp.ne.s32.totalorder %s97, %s98
    %p110 = scmp.eq.s32.totalorder %s15, 1
    %p111 = por %p109, %p110
    %p113 = scmp.ne.s32.totalorder %s98, %s112
    %p114 = scmp.eq.s32.totalorder %s15, 0
    %p115 = por %p113, %p114
    %p116 = scmp.le.s32.totalorder 1, %s9
    %p117 = scmp.lt.s32.totalorder %s9, 3
    %p118 = pnand %p116, %p117
    %p119 = pneg %p118
    // Predicated region
    $region9: #{l2constrained_forward.3} parent=5 // pred_check
      _
    $region10: #{l2constrained_forward.3} parent=5 // pred_check_branch
      %121 = sbr.rel (%p118) target = $region12
    $region11: #{l2constrained_forward.3} parent=5 // pred_region
      %s122 = ssub.s32 %s9, 1
    $region12: #{l2constrained_forward.3} parent=5 // pred_fallthru
      _
    %p123 = scmp.lt.s32.totalorder %s9, 2
    // Predicated region
    $region13: #{l2constrained_forward.3} parent=5 // pred_check
      %p124 = pneg %p123
    $region14: #{l2constrained_forward.3} parent=5 // pred_check_branch
      %126 = sbr.rel (%p124) target = $region16
    $region15: #{l2constrained_forward.3} parent=5 // pred_region
      // Predicated region
      $region17: #{l2constrained_forward.3} parent=15 // pred_check
        %p127 = pneg %p29
      $region18: #{l2constrained_forward.3} parent=15 // pred_check_branch
        %129 = sbr.rel (%p127) target = $region20
      $region19: #{l2constrained_forward.3} parent=15 // pred_region
        %s130 = smul.u32 18, %s9
        %p131 = scmp.lt.s32.totalorder %s130, 35
        %s132 = scalar_select %p131, %s130, 35
        %s133 = smul.addr %s132, 4
        %s134 = scalar_lea.vmem %s0, %s133
        %s135 = smul.u32 18, %s9
      $region20: #{l2constrained_forward.3} parent=15 // pred_fallthru
        _
      // Predicated region
      $region21: #{l2constrained_forward.3} parent=15 // pred_check
        %p136 = pneg %p55
      $region22: #{l2constrained_forward.3} parent=15 // pred_check_branch
        %138 = sbr.rel (%p136) target = $region24
      $region23: #{l2constrained_forward.3} parent=15 // pred_region
        %s139 = smul.u32 18, %s9
        %p140 = scmp.lt.s32.totalorder %s139, 35
        %s141 = scalar_select %p140, %s139, 35
        %s142 = smul.addr %s141, 4
        %s143 = scalar_lea.vmem %s1, %s142
        %s144 = smul.u32 18, %s9
      $region24: #{l2constrained_forward.3} parent=15 // pred_fallthru
        _
      // Predicated region
      $region25: #{l2constrained_forward.3} parent=15 // pred_check
        %p145 = pneg %p81
      $region26: #{l2constrained_forward.3} parent=15 // pred_check_branch
        %147 = sbr.rel (%p145) target = $region28
      $region27: #{l2constrained_forward.3} parent=15 // pred_region
        %s148 = smul.u32 288, %s9
        %p149 = scmp.lt.s32.totalorder %s148, 575
        %s150 = scalar_select %p149, %s148, 575
        %s151 = smul.addr %s150, 4
        %s152 = scalar_lea.vmem %s2, %s151
        %s153 = smul.u32 288, %s9
      $region28: #{l2constrained_forward.3} parent=15 // pred_fallthru
        _
    $region16: #{l2constrained_forward.3} parent=5 // pred_fallthru
      _
    %p154 = scmp.le.s32.totalorder 1, %s9
    %p155 = scmp.lt.s32.totalorder %s9, 3
    %p156 = pnand %p154, %p155
    %p157 = pneg %p156
    // Predicated region
    $region29: #{l2constrained_forward.3} parent=5 // pred_check
      _
    $region30: #{l2constrained_forward.3} parent=5 // pred_check_branch
      %159 = sbr.rel (%p156) target = $region32
    $region31: #{l2constrained_forward.3} parent=5 // pred_region
      %s160 = ssub.s32 %s9, 1
      %s161 = smul.u32 18, %s14
      %p162 = scmp.lt.s32.totalorder %s161, 35
      %s163 = scalar_select %p162, %s161, 35
      %s164 = smul.addr %s163, 4
      %s165 = scalar_lea.vmem %s0, %s164
      %p166 = pneg %p35
      %p167 = pneg %p32
      %s168 = smul.u32 18, %s14
      %p169 = scmp.lt.s32.totalorder %s168, 35
      %s170 = scalar_select %p169, %s168, 35
      %s171 = smul.addr %s170, 4
      %s172 = scalar_lea.vmem %s1, %s171
      %p173 = pneg %p61
      %p174 = pneg %p58
      %s175 = smul.u32 288, %s14
      %p176 = scmp.lt.s32.totalorder %s175, 575
      %s177 = scalar_select %p176, %s175, 575
      %s178 = smul.addr %s177, 4
      %s179 = scalar_lea.vmem %s2, %s178
      %p180 = pneg %p87
      %p181 = pneg %p84
      %p182 = pneg %p108
      %p183 = pneg %p105
      %s184 = smul.u32 18, %s14
      %p185 = scmp.lt.s32.totalorder %s184, 35
      %s186 = scalar_select %p185, %s184, 35
      %s187 = smul.addr %s186, 4
      %s188 = scalar_lea.vmem %s0, %s187
      %s189 = smul.u32 18, %s14
      %s190 = smul.u32 18, %s14
      %p191 = scmp.lt.s32.totalorder %s190, 35
      %s192 = scalar_select %p191, %s190, 35
      %s193 = smul.addr %s192, 4
      %s194 = scalar_lea.vmem %s1, %s193
      %s195 = smul.u32 18, %s14
      %s196 = smul.u32 288, %s14
      %p197 = scmp.lt.s32.totalorder %s196, 575
      %s198 = scalar_select %p197, %s196, 575
      %s199 = smul.addr %s198, 4
      %s200 = scalar_lea.vmem %s2, %s199
      %s201 = smul.u32 288, %s14
      %p203 = scmp.eq.s32.totalorder %s14, 0
      // Predicated region
      $region33: #{l2constrained_forward.3} parent=31 // pred_check
        %p204 = pneg %p203
      $region34: #{l2constrained_forward.3} parent=31 // pred_check_branch
        %206 = sbr.rel (%p204) target = $region36
      $region35: #{l2constrained_forward.3} parent=31 // pred_region
        %207 = vst [vmem:[#allocation2] sm:$0xf] 0.0
      $region36: #{l2constrained_forward.3} parent=31 // pred_fallthru
        _
      %v208 = vld [vmem:[%s188] sm:$0xff]
      %v209 = vld [vmem:[%s188 + $0x8] sm:$0xff]
      %v210 = vld [vmem:[%s188 + $0x10] sm:$0xff]
      %v211 = vld [vmem:[%s188 + $0x18] sm:$0xff]
      %v212 = vld [vmem:[%s188 + $0x20] sm:$0xff]
      %v213 = vld [vmem:[%s188 + $0x28] sm:$0xff]
      %v214 = vld [vmem:[%s188 + $0x30] sm:$0xff]
      %v215 = vld [vmem:[%s188 + $0x38] sm:$0xff]
      %v216 = vld [vmem:[%s188 + $0x40] sm:$0xff]
      %v217 = vld [vmem:[%s194] sm:$0xff]
      %v218 = vld [vmem:[%s194 + $0x8] sm:$0xff]
      %v219 = vld [vmem:[%s194 + $0x10] sm:$0xff]
      %v220 = vld [vmem:[%s194 + $0x18] sm:$0xff]
      %v221 = vld [vmem:[%s194 + $0x20] sm:$0xff]
      %v222 = vld [vmem:[%s194 + $0x28] sm:$0xff]
      %v223 = vld [vmem:[%s194 + $0x30] sm:$0xff]
      %v224 = vld [vmem:[%s194 + $0x38] sm:$0xff]
      %v225 = vld [vmem:[%s194 + $0x40] sm:$0xff]
      %v226 = vmul.f32 %v208, %v217
      %v227 = vmul.f32 %v209, %v218
      %v228 = vmul.f32 %v210, %v219
      %v229 = vmul.f32 %v211, %v220
      %v230 = vmul.f32 %v212, %v221
      %v231 = vmul.f32 %v213, %v222
      %v232 = vmul.f32 %v214, %v223
      %v233 = vmul.f32 %v215, %v224
      %v234 = vmul.f32 %v216, %v225
      %v244 = vcombine.high %v226, %v226
      %v245 = vcombine.high %v227, %v227
      %v246 = vcombine.high %v228, %v228
      %v247 = vcombine.high %v229, %v229
      %v248 = vcombine.high %v230, %v230
      %v249 = vcombine.high %v231, %v231
      %v250 = vcombine.high %v232, %v232
      %v251 = vcombine.high %v233, %v233
      %v252 = vcombine.high %v234, %v234
      %v262 = vpack.c.bf16 %v226, %v226
      %v263 = vpack.c.bf16 %v244, %v244
      %v264 = vpack.c.bf16 %v227, %v227
      %v265 = vpack.c.bf16 %v245, %v245
      %v266 = vpack.c.bf16 %v228, %v228
      %v267 = vpack.c.bf16 %v246, %v246
      %v268 = vpack.c.bf16 %v229, %v229
      %v269 = vpack.c.bf16 %v247, %v247
      %v270 = vpack.c.bf16 %v230, %v230
      %v271 = vpack.c.bf16 %v248, %v248
      %v272 = vpack.c.bf16 %v231, %v231
      %v273 = vpack.c.bf16 %v249, %v249
      %v274 = vpack.c.bf16 %v232, %v232
      %v275 = vpack.c.bf16 %v250, %v250
      %v276 = vpack.c.bf16 %v233, %v233
      %v277 = vpack.c.bf16 %v251, %v251
      %v278 = vpack.c.bf16 %v234, %v234
      %v279 = vpack.c.bf16 %v252, %v252
      %v280 = vld [vmem:[#allocation2] sm:$0xf]
      %v281 = vld [vmem:[%s200] sm:$0xf]
      %v282 = vld [vmem:[%s200 + $0x4] sm:$0xf]
      %v283 = vld [vmem:[%s200 + $0x8] sm:$0xf]
      %v284 = vld [vmem:[%s200 + $0xc] sm:$0xf]
      %v285 = vld [vmem:[%s200 + $0x10] sm:$0xf]
      %v286 = vld [vmem:[%s200 + $0x14] sm:$0xf]
      %v287 = vld [vmem:[%s200 + $0x18] sm:$0xf]
      %v288 = vld [vmem:[%s200 + $0x1c] sm:$0xf]
      %v289 = vld [vmem:[%s200 + $0x20] sm:$0xf]
      %v290 = vld [vmem:[%s200 + $0x24] sm:$0xf]
      %v291 = vld [vmem:[%s200 + $0x28] sm:$0xf]
      %v292 = vld [vmem:[%s200 + $0x2c] sm:$0xf]
      %v293 = vld [vmem:[%s200 + $0x30] sm:$0xf]
      %v294 = vld [vmem:[%s200 + $0x34] sm:$0xf]
      %v295 = vld [vmem:[%s200 + $0x38] sm:$0xf]
      %v296 = vld [vmem:[%s200 + $0x3c] sm:$0xf]
      %v297 = vld [vmem:[%s200 + $0x40] sm:$0xf]
      %v298 = vld [vmem:[%s200 + $0x44] sm:$0xf]
      %v299 = vld [vmem:[%s200 + $0x48] sm:$0xf]
      %v300 = vld [vmem:[%s200 + $0x4c] sm:$0xf]
      %v301 = vld [vmem:[%s200 + $0x50] sm:$0xf]
      %v302 = vld [vmem:[%s200 + $0x54] sm:$0xf]
      %v303 = vld [vmem:[%s200 + $0x58] sm:$0xf]
      %v304 = vld [vmem:[%s200 + $0x5c] sm:$0xf]
      %v305 = vld [vmem:[%s200 + $0x60] sm:$0xf]
      %v306 = vld [vmem:[%s200 + $0x64] sm:$0xf]
      %v307 = vld [vmem:[%s200 + $0x68] sm:$0xf]
      %v308 = vld [vmem:[%s200 + $0x6c] sm:$0xf]
      %v309 = vld [vmem:[%s200 + $0x70] sm:$0xf]
      %v310 = vld [vmem:[%s200 + $0x74] sm:$0xf]
      %v311 = vld [vmem:[%s200 + $0x78] sm:$0xf]
      %v312 = vld [vmem:[%s200 + $0x7c] sm:$0xf]
      %v313 = vld [vmem:[%s200 + $0x80] sm:$0xf]
      %v314 = vld [vmem:[%s200 + $0x84] sm:$0xf]
      %v315 = vld [vmem:[%s200 + $0x88] sm:$0xf]
      %v316 = vld [vmem:[%s200 + $0x8c] sm:$0xf]
      %v317 = vld [vmem:[%s200 + $0x90] sm:$0xf]
      %v318 = vld [vmem:[%s200 + $0x94] sm:$0xf]
      %v319 = vld [vmem:[%s200 + $0x98] sm:$0xf]
      %v320 = vld [vmem:[%s200 + $0x9c] sm:$0xf]
      %v321 = vld [vmem:[%s200 + $0xa0] sm:$0xf]
      %v322 = vld [vmem:[%s200 + $0xa4] sm:$0xf]
      %v323 = vld [vmem:[%s200 + $0xa8] sm:$0xf]
      %v324 = vld [vmem:[%s200 + $0xac] sm:$0xf]
      %v325 = vld [vmem:[%s200 + $0xb0] sm:$0xf]
      %v326 = vld [vmem:[%s200 + $0xb4] sm:$0xf]
      %v327 = vld [vmem:[%s200 + $0xb8] sm:$0xf]
      %v328 = vld [vmem:[%s200 + $0xbc] sm:$0xf]
      %v329 = vld [vmem:[%s200 + $0xc0] sm:$0xf]
      %v330 = vld [vmem:[%s200 + $0xc4] sm:$0xf]
      %v331 = vld [vmem:[%s200 + $0xc8] sm:$0xf]
      %v332 = vld [vmem:[%s200 + $0xcc] sm:$0xf]
      %v333 = vld [vmem:[%s200 + $0xd0] sm:$0xf]
      %v334 = vld [vmem:[%s200 + $0xd4] sm:$0xf]
      %v335 = vld [vmem:[%s200 + $0xd8] sm:$0xf]
      %v336 = vld [vmem:[%s200 + $0xdc] sm:$0xf]
      %v337 = vld [vmem:[%s200 + $0xe0] sm:$0xf]
      %v338 = vld [vmem:[%s200 + $0xe4] sm:$0xf]
      %v339 = vld [vmem:[%s200 + $0xe8] sm:$0xf]
      %v340 = vld [vmem:[%s200 + $0xec] sm:$0xf]
      %v341 = vld [vmem:[%s200 + $0xf0] sm:$0xf]
      %v342 = vld [vmem:[%s200 + $0xf4] sm:$0xf]
      %v343 = vld [vmem:[%s200 + $0xf8] sm:$0xf]
      %v344 = vld [vmem:[%s200 + $0xfc] sm:$0xf]
      %v345 = vld [vmem:[%s200 + $0x100] sm:$0xf]
      %v346 = vld [vmem:[%s200 + $0x104] sm:$0xf]
      %v347 = vld [vmem:[%s200 + $0x108] sm:$0xf]
      %v348 = vld [vmem:[%s200 + $0x10c] sm:$0xf]
      %v349 = vld [vmem:[%s200 + $0x110] sm:$0xf]
      %v350 = vld [vmem:[%s200 + $0x114] sm:$0xf]
      %v351 = vld [vmem:[%s200 + $0x118] sm:$0xf]
      %v352 = vld [vmem:[%s200 + $0x11c] sm:$0xf]
      %v353 = vld [vmem:[%s200 + $0x120] sm:$0xf]
      %v354 = vld [vmem:[%s200 + $0x124] sm:$0xf]
      %v355 = vld [vmem:[%s200 + $0x128] sm:$0xf]
      %v356 = vld [vmem:[%s200 + $0x12c] sm:$0xf]
      %v357 = vld [vmem:[%s200 + $0x130] sm:$0xf]
      %v358 = vld [vmem:[%s200 + $0x134] sm:$0xf]
      %v359 = vld [vmem:[%s200 + $0x138] sm:$0xf]
      %v360 = vld [vmem:[%s200 + $0x13c] sm:$0xf]
      %v361 = vld [vmem:[%s200 + $0x140] sm:$0xf]
      %v362 = vld [vmem:[%s200 + $0x144] sm:$0xf]
      %v363 = vld [vmem:[%s200 + $0x148] sm:$0xf]
      %v364 = vld [vmem:[%s200 + $0x14c] sm:$0xf]
      %v365 = vld [vmem:[%s200 + $0x150] sm:$0xf]
      %v366 = vld [vmem:[%s200 + $0x154] sm:$0xf]
      %v367 = vld [vmem:[%s200 + $0x158] sm:$0xf]
      %v368 = vld [vmem:[%s200 + $0x15c] sm:$0xf]
      %v369 = vld [vmem:[%s200 + $0x160] sm:$0xf]
      %v370 = vld [vmem:[%s200 + $0x164] sm:$0xf]
      %v371 = vld [vmem:[%s200 + $0x168] sm:$0xf]
      %v372 = vld [vmem:[%s200 + $0x16c] sm:$0xf]
      %v373 = vld [vmem:[%s200 + $0x170] sm:$0xf]
      %v374 = vld [vmem:[%s200 + $0x174] sm:$0xf]
      %v375 = vld [vmem:[%s200 + $0x178] sm:$0xf]
      %v376 = vld [vmem:[%s200 + $0x17c] sm:$0xf]
      %v377 = vld [vmem:[%s200 + $0x180] sm:$0xf]
      %v378 = vld [vmem:[%s200 + $0x184] sm:$0xf]
      %v379 = vld [vmem:[%s200 + $0x188] sm:$0xf]
      %v380 = vld [vmem:[%s200 + $0x18c] sm:$0xf]
      %v381 = vld [vmem:[%s200 + $0x190] sm:$0xf]
      %v382 = vld [vmem:[%s200 + $0x194] sm:$0xf]
      %v383 = vld [vmem:[%s200 + $0x198] sm:$0xf]
      %v384 = vld [vmem:[%s200 + $0x19c] sm:$0xf]
      %v385 = vld [vmem:[%s200 + $0x1a0] sm:$0xf]
      %v386 = vld [vmem:[%s200 + $0x1a4] sm:$0xf]
      %v387 = vld [vmem:[%s200 + $0x1a8] sm:$0xf]
      %v388 = vld [vmem:[%s200 + $0x1ac] sm:$0xf]
      %v389 = vld [vmem:[%s200 + $0x1b0] sm:$0xf]
      %v390 = vld [vmem:[%s200 + $0x1b4] sm:$0xf]
      %v391 = vld [vmem:[%s200 + $0x1b8] sm:$0xf]
      %v392 = vld [vmem:[%s200 + $0x1bc] sm:$0xf]
      %v393 = vld [vmem:[%s200 + $0x1c0] sm:$0xf]
      %v394 = vld [vmem:[%s200 + $0x1c4] sm:$0xf]
      %v395 = vld [vmem:[%s200 + $0x1c8] sm:$0xf]
      %v396 = vld [vmem:[%s200 + $0x1cc] sm:$0xf]
      %v397 = vld [vmem:[%s200 + $0x1d0] sm:$0xf]
      %v398 = vld [vmem:[%s200 + $0x1d4] sm:$0xf]
      %v399 = vld [vmem:[%s200 + $0x1d8] sm:$0xf]
      %v400 = vld [vmem:[%s200 + $0x1dc] sm:$0xf]
      %v401 = vld [vmem:[%s200 + $0x1e0] sm:$0xf]
      %v402 = vld [vmem:[%s200 + $0x1e4] sm:$0xf]
      %v403 = vld [vmem:[%s200 + $0x1e8] sm:$0xf]
      %v404 = vld [vmem:[%s200 + $0x1ec] sm:$0xf]
      %v405 = vld [vmem:[%s200 + $0x1f0] sm:$0xf]
      %v406 = vld [vmem:[%s200 + $0x1f4] sm:$0xf]
      %v407 = vld [vmem:[%s200 + $0x1f8] sm:$0xf]
      %v408 = vld [vmem:[%s200 + $0x1fc] sm:$0xf]
      %v409 = vld [vmem:[%s200 + $0x200] sm:$0xf]
      %v410 = vld [vmem:[%s200 + $0x204] sm:$0xf]
      %v411 = vld [vmem:[%s200 + $0x208] sm:$0xf]
      %v412 = vld [vmem:[%s200 + $0x20c] sm:$0xf]
      %v413 = vld [vmem:[%s200 + $0x210] sm:$0xf]
      %v414 = vld [vmem:[%s200 + $0x214] sm:$0xf]
      %v415 = vld [vmem:[%s200 + $0x218] sm:$0xf]
      %v416 = vld [vmem:[%s200 + $0x21c] sm:$0xf]
      %v417 = vld [vmem:[%s200 + $0x220] sm:$0xf]
      %v418 = vld [vmem:[%s200 + $0x224] sm:$0xf]
      %v419 = vld [vmem:[%s200 + $0x228] sm:$0xf]
      %v420 = vld [vmem:[%s200 + $0x22c] sm:$0xf]
      %v421 = vld [vmem:[%s200 + $0x230] sm:$0xf]
      %v422 = vld [vmem:[%s200 + $0x234] sm:$0xf]
      %v423 = vld [vmem:[%s200 + $0x238] sm:$0xf]
      %v424 = vld [vmem:[%s200 + $0x23c] sm:$0xf]
      %v425 = vld [vmem:[%s200 + $0x240] sm:$0xf]
      %v426 = vld [vmem:[%s200 + $0x244] sm:$0xf]
      %v427 = vld [vmem:[%s200 + $0x248] sm:$0xf]
      %v428 = vld [vmem:[%s200 + $0x24c] sm:$0xf]
      %v429 = vld [vmem:[%s200 + $0x250] sm:$0xf]
      %v430 = vld [vmem:[%s200 + $0x254] sm:$0xf]
      %v431 = vld [vmem:[%s200 + $0x258] sm:$0xf]
      %v432 = vld [vmem:[%s200 + $0x25c] sm:$0xf]
      %v433 = vld [vmem:[%s200 + $0x260] sm:$0xf]
      %v434 = vld [vmem:[%s200 + $0x264] sm:$0xf]
      %v435 = vld [vmem:[%s200 + $0x268] sm:$0xf]
      %v436 = vld [vmem:[%s200 + $0x26c] sm:$0xf]
      %v437 = vld [vmem:[%s200 + $0x270] sm:$0xf]
      %v438 = vld [vmem:[%s200 + $0x274] sm:$0xf]
      %v439 = vld [vmem:[%s200 + $0x278] sm:$0xf]
      %v440 = vld [vmem:[%s200 + $0x27c] sm:$0xf]
      %v441 = vld [vmem:[%s200 + $0x280] sm:$0xf]
      %v442 = vld [vmem:[%s200 + $0x284] sm:$0xf]
      %v443 = vld [vmem:[%s200 + $0x288] sm:$0xf]
      %v444 = vld [vmem:[%s200 + $0x28c] sm:$0xf]
      %v445 = vld [vmem:[%s200 + $0x290] sm:$0xf]
      %v446 = vld [vmem:[%s200 + $0x294] sm:$0xf]
      %v447 = vld [vmem:[%s200 + $0x298] sm:$0xf]
      %v448 = vld [vmem:[%s200 + $0x29c] sm:$0xf]
      %v449 = vld [vmem:[%s200 + $0x2a0] sm:$0xf]
      %v450 = vld [vmem:[%s200 + $0x2a4] sm:$0xf]
      %v451 = vld [vmem:[%s200 + $0x2a8] sm:$0xf]
      %v452 = vld [vmem:[%s200 + $0x2ac] sm:$0xf]
      %v453 = vld [vmem:[%s200 + $0x2b0] sm:$0xf]
      %v454 = vld [vmem:[%s200 + $0x2b4] sm:$0xf]
      %v455 = vld [vmem:[%s200 + $0x2b8] sm:$0xf]
      %v456 = vld [vmem:[%s200 + $0x2bc] sm:$0xf]
      %v457 = vld [vmem:[%s200 + $0x2c0] sm:$0xf]
      %v458 = vld [vmem:[%s200 + $0x2c4] sm:$0xf]
      %v459 = vld [vmem:[%s200 + $0x2c8] sm:$0xf]
      %v460 = vld [vmem:[%s200 + $0x2cc] sm:$0xf]
      %v461 = vld [vmem:[%s200 + $0x2d0] sm:$0xf]
      %v462 = vld [vmem:[%s200 + $0x2d4] sm:$0xf]
      %v463 = vld [vmem:[%s200 + $0x2d8] sm:$0xf]
      %v464 = vld [vmem:[%s200 + $0x2dc] sm:$0xf]
      %v465 = vld [vmem:[%s200 + $0x2e0] sm:$0xf]
      %v466 = vld [vmem:[%s200 + $0x2e4] sm:$0xf]
      %v467 = vld [vmem:[%s200 + $0x2e8] sm:$0xf]
      %v468 = vld [vmem:[%s200 + $0x2ec] sm:$0xf]
      %v469 = vld [vmem:[%s200 + $0x2f0] sm:$0xf]
      %v470 = vld [vmem:[%s200 + $0x2f4] sm:$0xf]
      %v471 = vld [vmem:[%s200 + $0x2f8] sm:$0xf]
      %v472 = vld [vmem:[%s200 + $0x2fc] sm:$0xf]
      %v473 = vld [vmem:[%s200 + $0x300] sm:$0xf]
      %v474 = vld [vmem:[%s200 + $0x304] sm:$0xf]
      %v475 = vld [vmem:[%s200 + $0x308] sm:$0xf]
      %v476 = vld [vmem:[%s200 + $0x30c] sm:$0xf]
      %v477 = vld [vmem:[%s200 + $0x310] sm:$0xf]
      %v478 = vld [vmem:[%s200 + $0x314] sm:$0xf]
      %v479 = vld [vmem:[%s200 + $0x318] sm:$0xf]
      %v480 = vld [vmem:[%s200 + $0x31c] sm:$0xf]
      %v481 = vld [vmem:[%s200 + $0x320] sm:$0xf]
      %v482 = vld [vmem:[%s200 + $0x324] sm:$0xf]
      %v483 = vld [vmem:[%s200 + $0x328] sm:$0xf]
      %v484 = vld [vmem:[%s200 + $0x32c] sm:$0xf]
      %v485 = vld [vmem:[%s200 + $0x330] sm:$0xf]
      %v486 = vld [vmem:[%s200 + $0x334] sm:$0xf]
      %v487 = vld [vmem:[%s200 + $0x338] sm:$0xf]
      %v488 = vld [vmem:[%s200 + $0x33c] sm:$0xf]
      %v489 = vld [vmem:[%s200 + $0x340] sm:$0xf]
      %v490 = vld [vmem:[%s200 + $0x344] sm:$0xf]
      %v491 = vld [vmem:[%s200 + $0x348] sm:$0xf]
      %v492 = vld [vmem:[%s200 + $0x34c] sm:$0xf]
      %v493 = vld [vmem:[%s200 + $0x350] sm:$0xf]
      %v494 = vld [vmem:[%s200 + $0x354] sm:$0xf]
      %v495 = vld [vmem:[%s200 + $0x358] sm:$0xf]
      %v496 = vld [vmem:[%s200 + $0x35c] sm:$0xf]
      %v497 = vld [vmem:[%s200 + $0x360] sm:$0xf]
      %v498 = vld [vmem:[%s200 + $0x364] sm:$0xf]
      %v499 = vld [vmem:[%s200 + $0x368] sm:$0xf]
      %v500 = vld [vmem:[%s200 + $0x36c] sm:$0xf]
      %v501 = vld [vmem:[%s200 + $0x370] sm:$0xf]
      %v502 = vld [vmem:[%s200 + $0x374] sm:$0xf]
      %v503 = vld [vmem:[%s200 + $0x378] sm:$0xf]
      %v504 = vld [vmem:[%s200 + $0x37c] sm:$0xf]
      %v505 = vld [vmem:[%s200 + $0x380] sm:$0xf]
      %v506 = vld [vmem:[%s200 + $0x384] sm:$0xf]
      %v507 = vld [vmem:[%s200 + $0x388] sm:$0xf]
      %v508 = vld [vmem:[%s200 + $0x38c] sm:$0xf]
      %v509 = vld [vmem:[%s200 + $0x390] sm:$0xf]
      %v510 = vld [vmem:[%s200 + $0x394] sm:$0xf]
      %v511 = vld [vmem:[%s200 + $0x398] sm:$0xf]
      %v512 = vld [vmem:[%s200 + $0x39c] sm:$0xf]
      %v513 = vld [vmem:[%s200 + $0x3a0] sm:$0xf]
      %v514 = vld [vmem:[%s200 + $0x3a4] sm:$0xf]
      %v515 = vld [vmem:[%s200 + $0x3a8] sm:$0xf]
      %v516 = vld [vmem:[%s200 + $0x3ac] sm:$0xf]
      %v517 = vld [vmem:[%s200 + $0x3b0] sm:$0xf]
      %v518 = vld [vmem:[%s200 + $0x3b4] sm:$0xf]
      %v519 = vld [vmem:[%s200 + $0x3b8] sm:$0xf]
      %v520 = vld [vmem:[%s200 + $0x3bc] sm:$0xf]
      %v521 = vld [vmem:[%s200 + $0x3c0] sm:$0xf]
      %v522 = vld [vmem:[%s200 + $0x3c4] sm:$0xf]
      %v523 = vld [vmem:[%s200 + $0x3c8] sm:$0xf]
      %v524 = vld [vmem:[%s200 + $0x3cc] sm:$0xf]
      %v525 = vld [vmem:[%s200 + $0x3d0] sm:$0xf]
      %v526 = vld [vmem:[%s200 + $0x3d4] sm:$0xf]
      %v527 = vld [vmem:[%s200 + $0x3d8] sm:$0xf]
      %v528 = vld [vmem:[%s200 + $0x3dc] sm:$0xf]
      %v529 = vld [vmem:[%s200 + $0x3e0] sm:$0xf]
      %v530 = vld [vmem:[%s200 + $0x3e4] sm:$0xf]
      %v531 = vld [vmem:[%s200 + $0x3e8] sm:$0xf]
      %v532 = vld [vmem:[%s200 + $0x3ec] sm:$0xf]
      %v533 = vld [vmem:[%s200 + $0x3f0] sm:$0xf]
      %v534 = vld [vmem:[%s200 + $0x3f4] sm:$0xf]
      %v535 = vld [vmem:[%s200 + $0x3f8] sm:$0xf]
      %v536 = vld [vmem:[%s200 + $0x3fc] sm:$0xf]
      %v537 = vld [vmem:[%s200 + $0x400] sm:$0xf]
      %v538 = vld [vmem:[%s200 + $0x404] sm:$0xf]
      %v539 = vld [vmem:[%s200 + $0x408] sm:$0xf]
      %v540 = vld [vmem:[%s200 + $0x40c] sm:$0xf]
      %v541 = vld [vmem:[%s200 + $0x410] sm:$0xf]
      %v542 = vld [vmem:[%s200 + $0x414] sm:$0xf]
      %v543 = vld [vmem:[%s200 + $0x418] sm:$0xf]
      %v544 = vld [vmem:[%s200 + $0x41c] sm:$0xf]
      %v545 = vld [vmem:[%s200 + $0x420] sm:$0xf]
      %v546 = vld [vmem:[%s200 + $0x424] sm:$0xf]
      %v547 = vld [vmem:[%s200 + $0x428] sm:$0xf]
      %v548 = vld [vmem:[%s200 + $0x42c] sm:$0xf]
      %v549 = vld [vmem:[%s200 + $0x430] sm:$0xf]
      %v550 = vld [vmem:[%s200 + $0x434] sm:$0xf]
      %v551 = vld [vmem:[%s200 + $0x438] sm:$0xf]
      %v552 = vld [vmem:[%s200 + $0x43c] sm:$0xf]
      %v553 = vld [vmem:[%s200 + $0x440] sm:$0xf]
      %v554 = vld [vmem:[%s200 + $0x444] sm:$0xf]
      %v555 = vld [vmem:[%s200 + $0x448] sm:$0xf]
      %v556 = vld [vmem:[%s200 + $0x44c] sm:$0xf]
      %v557 = vld [vmem:[%s200 + $0x450] sm:$0xf]
      %v558 = vld [vmem:[%s200 + $0x454] sm:$0xf]
      %v559 = vld [vmem:[%s200 + $0x458] sm:$0xf]
      %v560 = vld [vmem:[%s200 + $0x45c] sm:$0xf]
      %v561 = vld [vmem:[%s200 + $0x460] sm:$0xf]
      %v562 = vld [vmem:[%s200 + $0x464] sm:$0xf]
      %v563 = vld [vmem:[%s200 + $0x468] sm:$0xf]
      %v564 = vld [vmem:[%s200 + $0x46c] sm:$0xf]
      %v565 = vld [vmem:[%s200 + $0x470] sm:$0xf]
      %v566 = vld [vmem:[%s200 + $0x474] sm:$0xf]
      %v567 = vld [vmem:[%s200 + $0x478] sm:$0xf]
      %v568 = vld [vmem:[%s200 + $0x47c] sm:$0xf]
      %v857 = vunpack.c.l.b16 %v281
      %v858 = vunpack.c.l.b16 %v282
      %v859 = vunpack.c.l.b16 %v283
      %v860 = vunpack.c.l.b16 %v284
      %v861 = vunpack.c.l.b16 %v285
      %v862 = vunpack.c.l.b16 %v286
      %v863 = vunpack.c.l.b16 %v287
      %v864 = vunpack.c.l.b16 %v288
      %v865 = vunpack.c.l.b16 %v289
      %v866 = vunpack.c.l.b16 %v290
      %v867 = vunpack.c.l.b16 %v291
      %v868 = vunpack.c.l.b16 %v292
      %v869 = vunpack.c.l.b16 %v293
      %v870 = vunpack.c.l.b16 %v294
      %v871 = vunpack.c.l.b16 %v295
      %v872 = vunpack.c.l.b16 %v296
      %v873 = vunpack.c.l.b16 %v297
      %v874 = vunpack.c.l.b16 %v298
      %v875 = vunpack.c.l.b16 %v299
      %v876 = vunpack.c.l.b16 %v300
      %v877 = vunpack.c.l.b16 %v301
      %v878 = vunpack.c.l.b16 %v302
      %v879 = vunpack.c.l.b16 %v303
      %v880 = vunpack.c.l.b16 %v304
      %v881 = vunpack.c.l.b16 %v305
      %v882 = vunpack.c.l.b16 %v306
      %v883 = vunpack.c.l.b16 %v307
      %v884 = vunpack.c.l.b16 %v308
      %v885 = vunpack.c.l.b16 %v309
      %v886 = vunpack.c.l.b16 %v310
      %v887 = vunpack.c.l.b16 %v311
      %v888 = vunpack.c.l.b16 %v312
      %v889 = vunpack.c.l.b16 %v313
      %v890 = vunpack.c.l.b16 %v314
      %v891 = vunpack.c.l.b16 %v315
      %v892 = vunpack.c.l.b16 %v316
      %v893 = vunpack.c.l.b16 %v317
      %v894 = vunpack.c.l.b16 %v318
      %v895 = vunpack.c.l.b16 %v319
      %v896 = vunpack.c.l.b16 %v320
      %v897 = vunpack.c.l.b16 %v321
      %v898 = vunpack.c.l.b16 %v322
      %v899 = vunpack.c.l.b16 %v323
      %v900 = vunpack.c.l.b16 %v324
      %v901 = vunpack.c.l.b16 %v325
      %v902 = vunpack.c.l.b16 %v326
      %v903 = vunpack.c.l.b16 %v327
      %v904 = vunpack.c.l.b16 %v328
      %v905 = vunpack.c.l.b16 %v329
      %v906 = vunpack.c.l.b16 %v330
      %v907 = vunpack.c.l.b16 %v331
      %v908 = vunpack.c.l.b16 %v332
      %v909 = vunpack.c.l.b16 %v333
      %v910 = vunpack.c.l.b16 %v334
      %v911 = vunpack.c.l.b16 %v335
      %v912 = vunpack.c.l.b16 %v336
      %v913 = vunpack.c.l.b16 %v337
      %v914 = vunpack.c.l.b16 %v338
      %v915 = vunpack.c.l.b16 %v339
      %v916 = vunpack.c.l.b16 %v340
      %v917 = vunpack.c.l.b16 %v341
      %v918 = vunpack.c.l.b16 %v342
      %v919 = vunpack.c.l.b16 %v343
      %v920 = vunpack.c.l.b16 %v344
      %v921 = vunpack.c.l.b16 %v345
      %v922 = vunpack.c.l.b16 %v346
      %v923 = vunpack.c.l.b16 %v347
      %v924 = vunpack.c.l.b16 %v348
      %v925 = vunpack.c.l.b16 %v349
      %v926 = vunpack.c.l.b16 %v350
      %v927 = vunpack.c.l.b16 %v351
      %v928 = vunpack.c.l.b16 %v352
      %v929 = vunpack.c.l.b16 %v353
      %v930 = vunpack.c.l.b16 %v354
      %v931 = vunpack.c.l.b16 %v355
      %v932 = vunpack.c.l.b16 %v356
      %v933 = vunpack.c.l.b16 %v357
      %v934 = vunpack.c.l.b16 %v358
      %v935 = vunpack.c.l.b16 %v359
      %v936 = vunpack.c.l.b16 %v360
      %v937 = vunpack.c.l.b16 %v361
      %v938 = vunpack.c.l.b16 %v362
      %v939 = vunpack.c.l.b16 %v363
      %v940 = vunpack.c.l.b16 %v364
      %v941 = vunpack.c.l.b16 %v365
      %v942 = vunpack.c.l.b16 %v366
      %v943 = vunpack.c.l.b16 %v367
      %v944 = vunpack.c.l.b16 %v368
      %v945 = vunpack.c.l.b16 %v369
      %v946 = vunpack.c.l.b16 %v370
      %v947 = vunpack.c.l.b16 %v371
      %v948 = vunpack.c.l.b16 %v372
      %v949 = vunpack.c.l.b16 %v373
      %v950 = vunpack.c.l.b16 %v374
      %v951 = vunpack.c.l.b16 %v375
      %v952 = vunpack.c.l.b16 %v376
      %v953 = vunpack.c.l.b16 %v377
      %v954 = vunpack.c.l.b16 %v378
      %v955 = vunpack.c.l.b16 %v379
      %v956 = vunpack.c.l.b16 %v380
      %v957 = vunpack.c.l.b16 %v381
      %v958 = vunpack.c.l.b16 %v382
      %v959 = vunpack.c.l.b16 %v383
      %v960 = vunpack.c.l.b16 %v384
      %v961 = vunpack.c.l.b16 %v385
      %v962 = vunpack.c.l.b16 %v386
      %v963 = vunpack.c.l.b16 %v387
      %v964 = vunpack.c.l.b16 %v388
      %v965 = vunpack.c.l.b16 %v389
      %v966 = vunpack.c.l.b16 %v390
      %v967 = vunpack.c.l.b16 %v391
      %v968 = vunpack.c.l.b16 %v392
      %v969 = vunpack.c.l.b16 %v393
      %v970 = vunpack.c.l.b16 %v394
      %v971 = vunpack.c.l.b16 %v395
      %v972 = vunpack.c.l.b16 %v396
      %v973 = vunpack.c.l.b16 %v397
      %v974 = vunpack.c.l.b16 %v398
      %v975 = vunpack.c.l.b16 %v399
      %v976 = vunpack.c.l.b16 %v400
      %v977 = vunpack.c.l.b16 %v401
      %v978 = vunpack.c.l.b16 %v402
      %v979 = vunpack.c.l.b16 %v403
      %v980 = vunpack.c.l.b16 %v404
      %v981 = vunpack.c.l.b16 %v405
      %v982 = vunpack.c.l.b16 %v406
      %v983 = vunpack.c.l.b16 %v407
      %v984 = vunpack.c.l.b16 %v408
      %v985 = vunpack.c.l.b16 %v409
      %v986 = vunpack.c.l.b16 %v410
      %v987 = vunpack.c.l.b16 %v411
      %v988 = vunpack.c.l.b16 %v412
      %v989 = vunpack.c.l.b16 %v413
      %v990 = vunpack.c.l.b16 %v414
      %v991 = vunpack.c.l.b16 %v415
      %v992 = vunpack.c.l.b16 %v416
      %v993 = vunpack.c.l.b16 %v417
      %v994 = vunpack.c.l.b16 %v418
      %v995 = vunpack.c.l.b16 %v419
      %v996 = vunpack.c.l.b16 %v420
      %v997 = vunpack.c.l.b16 %v421
      %v998 = vunpack.c.l.b16 %v422
      %v999 = vunpack.c.l.b16 %v423
      %v1000 = vunpack.c.l.b16 %v424
      %v1001 = vunpack.c.l.b16 %v425
      %v1002 = vunpack.c.l.b16 %v426
      %v1003 = vunpack.c.l.b16 %v427
      %v1004 = vunpack.c.l.b16 %v428
      %v1005 = vunpack.c.l.b16 %v429
      %v1006 = vunpack.c.l.b16 %v430
      %v1007 = vunpack.c.l.b16 %v431
      %v1008 = vunpack.c.l.b16 %v432
      %v1009 = vunpack.c.l.b16 %v433
      %v1010 = vunpack.c.l.b16 %v434
      %v1011 = vunpack.c.l.b16 %v435
      %v1012 = vunpack.c.l.b16 %v436
      %v1013 = vunpack.c.l.b16 %v437
      %v1014 = vunpack.c.l.b16 %v438
      %v1015 = vunpack.c.l.b16 %v439
      %v1016 = vunpack.c.l.b16 %v440
      %v1017 = vunpack.c.l.b16 %v441
      %v1018 = vunpack.c.l.b16 %v442
      %v1019 = vunpack.c.l.b16 %v443
      %v1020 = vunpack.c.l.b16 %v444
      %v1021 = vunpack.c.l.b16 %v445
      %v1022 = vunpack.c.l.b16 %v446
      %v1023 = vunpack.c.l.b16 %v447
      %v1024 = vunpack.c.l.b16 %v448
      %v1025 = vunpack.c.l.b16 %v449
      %v1026 = vunpack.c.l.b16 %v450
      %v1027 = vunpack.c.l.b16 %v451
      %v1028 = vunpack.c.l.b16 %v452
      %v1029 = vunpack.c.l.b16 %v453
      %v1030 = vunpack.c.l.b16 %v454
      %v1031 = vunpack.c.l.b16 %v455
      %v1032 = vunpack.c.l.b16 %v456
      %v1033 = vunpack.c.l.b16 %v457
      %v1034 = vunpack.c.l.b16 %v458
      %v1035 = vunpack.c.l.b16 %v459
      %v1036 = vunpack.c.l.b16 %v460
      %v1037 = vunpack.c.l.b16 %v461
      %v1038 = vunpack.c.l.b16 %v462
      %v1039 = vunpack.c.l.b16 %v463
      %v1040 = vunpack.c.l.b16 %v464
      %v1041 = vunpack.c.l.b16 %v465
      %v1042 = vunpack.c.l.b16 %v466
      %v1043 = vunpack.c.l.b16 %v467
      %v1044 = vunpack.c.l.b16 %v468
      %v1045 = vunpack.c.l.b16 %v469
      %v1046 = vunpack.c.l.b16 %v470
      %v1047 = vunpack.c.l.b16 %v471
      %v1048 = vunpack.c.l.b16 %v472
      %v1049 = vunpack.c.l.b16 %v473
      %v1050 = vunpack.c.l.b16 %v474
      %v1051 = vunpack.c.l.b16 %v475
      %v1052 = vunpack.c.l.b16 %v476
      %v1053 = vunpack.c.l.b16 %v477
      %v1054 = vunpack.c.l.b16 %v478
      %v1055 = vunpack.c.l.b16 %v479
      %v1056 = vunpack.c.l.b16 %v480
      %v1057 = vunpack.c.l.b16 %v481
      %v1058 = vunpack.c.l.b16 %v482
      %v1059 = vunpack.c.l.b16 %v483
      %v1060 = vunpack.c.l.b16 %v484
      %v1061 = vunpack.c.l.b16 %v485
      %v1062 = vunpack.c.l.b16 %v486
      %v1063 = vunpack.c.l.b16 %v487
      %v1064 = vunpack.c.l.b16 %v488
      %v1065 = vunpack.c.l.b16 %v489
      %v1066 = vunpack.c.l.b16 %v490
      %v1067 = vunpack.c.l.b16 %v491
      %v1068 = vunpack.c.l.b16 %v492
      %v1069 = vunpack.c.l.b16 %v493
      %v1070 = vunpack.c.l.b16 %v494
      %v1071 = vunpack.c.l.b16 %v495
      %v1072 = vunpack.c.l.b16 %v496
      %v1073 = vunpack.c.l.b16 %v497
      %v1074 = vunpack.c.l.b16 %v498
      %v1075 = vunpack.c.l.b16 %v499
      %v1076 = vunpack.c.l.b16 %v500
      %v1077 = vunpack.c.l.b16 %v501
      %v1078 = vunpack.c.l.b16 %v502
      %v1079 = vunpack.c.l.b16 %v503
      %v1080 = vunpack.c.l.b16 %v504
      %v1081 = vunpack.c.l.b16 %v505
      %v1082 = vunpack.c.l.b16 %v506
      %v1083 = vunpack.c.l.b16 %v507
      %v1084 = vunpack.c.l.b16 %v508
      %v1085 = vunpack.c.l.b16 %v509
      %v1086 = vunpack.c.l.b16 %v510
      %v1087 = vunpack.c.l.b16 %v511
      %v1088 = vunpack.c.l.b16 %v512
      %v1089 = vunpack.c.l.b16 %v513
      %v1090 = vunpack.c.l.b16 %v514
      %v1091 = vunpack.c.l.b16 %v515
      %v1092 = vunpack.c.l.b16 %v516
      %v1093 = vunpack.c.l.b16 %v517
      %v1094 = vunpack.c.l.b16 %v518
      %v1095 = vunpack.c.l.b16 %v519
      %v1096 = vunpack.c.l.b16 %v520
      %v1097 = vunpack.c.l.b16 %v521
      %v1098 = vunpack.c.l.b16 %v522
      %v1099 = vunpack.c.l.b16 %v523
      %v1100 = vunpack.c.l.b16 %v524
      %v1101 = vunpack.c.l.b16 %v525
      %v1102 = vunpack.c.l.b16 %v526
      %v1103 = vunpack.c.l.b16 %v527
      %v1104 = vunpack.c.l.b16 %v528
      %v1105 = vunpack.c.l.b16 %v529
      %v1106 = vunpack.c.l.b16 %v530
      %v1107 = vunpack.c.l.b16 %v531
      %v1108 = vunpack.c.l.b16 %v532
      %v1109 = vunpack.c.l.b16 %v533
      %v1110 = vunpack.c.l.b16 %v534
      %v1111 = vunpack.c.l.b16 %v535
      %v1112 = vunpack.c.l.b16 %v536
      %v1113 = vunpack.c.l.b16 %v537
      %v1114 = vunpack.c.l.b16 %v538
      %v1115 = vunpack.c.l.b16 %v539
      %v1116 = vunpack.c.l.b16 %v540
      %v1117 = vunpack.c.l.b16 %v541
      %v1118 = vunpack.c.l.b16 %v542
      %v1119 = vunpack.c.l.b16 %v543
      %v1120 = vunpack.c.l.b16 %v544
      %v1121 = vunpack.c.l.b16 %v545
      %v1122 = vunpack.c.l.b16 %v546
      %v1123 = vunpack.c.l.b16 %v547
      %v1124 = vunpack.c.l.b16 %v548
      %v1125 = vunpack.c.l.b16 %v549
      %v1126 = vunpack.c.l.b16 %v550
      %v1127 = vunpack.c.l.b16 %v551
      %v1128 = vunpack.c.l.b16 %v552
      %v1129 = vunpack.c.l.b16 %v553
      %v1130 = vunpack.c.l.b16 %v554
      %v1131 = vunpack.c.l.b16 %v555
      %v1132 = vunpack.c.l.b16 %v556
      %v1133 = vunpack.c.l.b16 %v557
      %v1134 = vunpack.c.l.b16 %v558
      %v1135 = vunpack.c.l.b16 %v559
      %v1136 = vunpack.c.l.b16 %v560
      %v1137 = vunpack.c.l.b16 %v561
      %v1138 = vunpack.c.l.b16 %v562
      %v1139 = vunpack.c.l.b16 %v563
      %v1140 = vunpack.c.l.b16 %v564
      %v1141 = vunpack.c.l.b16 %v565
      %v1142 = vunpack.c.l.b16 %v566
      %v1143 = vunpack.c.l.b16 %v567
      %v1144 = vunpack.c.l.b16 %v568
      %v1145 = vpack.c.b16 %v858, %v857
      %v1146 = vpack.c.b16 %v860, %v859
      %v1147 = vpack.c.b16 %v862, %v861
      %v1148 = vpack.c.b16 %v864, %v863
      %v1149 = vpack.c.b16 %v866, %v865
      %v1150 = vpack.c.b16 %v868, %v867
      %v1151 = vpack.c.b16 %v870, %v869
      %v1152 = vpack.c.b16 %v872, %v871
      %v1153 = vpack.c.b16 %v874, %v873
      %v1154 = vpack.c.b16 %v876, %v875
      %v1155 = vpack.c.b16 %v878, %v877
      %v1156 = vpack.c.b16 %v880, %v879
      %v1157 = vpack.c.b16 %v882, %v881
      %v1158 = vpack.c.b16 %v884, %v883
      %v1159 = vpack.c.b16 %v886, %v885
      %v1160 = vpack.c.b16 %v888, %v887
      %v1161 = vpack.c.b16 %v890, %v889
      %v1162 = vpack.c.b16 %v892, %v891
      %v1163 = vpack.c.b16 %v894, %v893
      %v1164 = vpack.c.b16 %v896, %v895
      %v1165 = vpack.c.b16 %v898, %v897
      %v1166 = vpack.c.b16 %v900, %v899
      %v1167 = vpack.c.b16 %v902, %v901
      %v1168 = vpack.c.b16 %v904, %v903
      %v1169 = vpack.c.b16 %v906, %v905
      %v1170 = vpack.c.b16 %v908, %v907
      %v1171 = vpack.c.b16 %v910, %v909
      %v1172 = vpack.c.b16 %v912, %v911
      %v1173 = vpack.c.b16 %v914, %v913
      %v1174 = vpack.c.b16 %v916, %v915
      %v1175 = vpack.c.b16 %v918, %v917
      %v1176 = vpack.c.b16 %v920, %v919
      %v1177 = vpack.c.b16 %v922, %v921
      %v1178 = vpack.c.b16 %v924, %v923
      %v1179 = vpack.c.b16 %v926, %v925
      %v1180 = vpack.c.b16 %v928, %v927
      %v1181 = vpack.c.b16 %v930, %v929
      %v1182 = vpack.c.b16 %v932, %v931
      %v1183 = vpack.c.b16 %v934, %v933
      %v1184 = vpack.c.b16 %v936, %v935
      %v1185 = vpack.c.b16 %v938, %v937
      %v1186 = vpack.c.b16 %v940, %v939
      %v1187 = vpack.c.b16 %v942, %v941
      %v1188 = vpack.c.b16 %v944, %v943
      %v1189 = vpack.c.b16 %v946, %v945
      %v1190 = vpack.c.b16 %v948, %v947
      %v1191 = vpack.c.b16 %v950, %v949
      %v1192 = vpack.c.b16 %v952, %v951
      %v1193 = vpack.c.b16 %v954, %v953
      %v1194 = vpack.c.b16 %v956, %v955
      %v1195 = vpack.c.b16 %v958, %v957
      %v1196 = vpack.c.b16 %v960, %v959
      %v1197 = vpack.c.b16 %v962, %v961
      %v1198 = vpack.c.b16 %v964, %v963
      %v1199 = vpack.c.b16 %v966, %v965
      %v1200 = vpack.c.b16 %v968, %v967
      %v1201 = vpack.c.b16 %v970, %v969
      %v1202 = vpack.c.b16 %v972, %v971
      %v1203 = vpack.c.b16 %v974, %v973
      %v1204 = vpack.c.b16 %v976, %v975
      %v1205 = vpack.c.b16 %v978, %v977
      %v1206 = vpack.c.b16 %v980, %v979
      %v1207 = vpack.c.b16 %v982, %v981
      %v1208 = vpack.c.b16 %v984, %v983
      %v1209 = vpack.c.b16 %v986, %v985
      %v1210 = vpack.c.b16 %v988, %v987
      %v1211 = vpack.c.b16 %v990, %v989
      %v1212 = vpack.c.b16 %v992, %v991
      %v1213 = vpack.c.b16 %v994, %v993
      %v1214 = vpack.c.b16 %v996, %v995
      %v1215 = vpack.c.b16 %v998, %v997
      %v1216 = vpack.c.b16 %v1000, %v999
      %v1217 = vpack.c.b16 %v1002, %v1001
      %v1218 = vpack.c.b16 %v1004, %v1003
      %v1219 = vpack.c.b16 %v1006, %v1005
      %v1220 = vpack.c.b16 %v1008, %v1007
      %v1221 = vpack.c.b16 %v1010, %v1009
      %v1222 = vpack.c.b16 %v1012, %v1011
      %v1223 = vpack.c.b16 %v1014, %v1013
      %v1224 = vpack.c.b16 %v1016, %v1015
      %v1225 = vpack.c.b16 %v1018, %v1017
      %v1226 = vpack.c.b16 %v1020, %v1019
      %v1227 = vpack.c.b16 %v1022, %v1021
      %v1228 = vpack.c.b16 %v1024, %v1023
      %v1229 = vpack.c.b16 %v1026, %v1025
      %v1230 = vpack.c.b16 %v1028, %v1027
      %v1231 = vpack.c.b16 %v1030, %v1029
      %v1232 = vpack.c.b16 %v1032, %v1031
      %v1233 = vpack.c.b16 %v1034, %v1033
      %v1234 = vpack.c.b16 %v1036, %v1035
      %v1235 = vpack.c.b16 %v1038, %v1037
      %v1236 = vpack.c.b16 %v1040, %v1039
      %v1237 = vpack.c.b16 %v1042, %v1041
      %v1238 = vpack.c.b16 %v1044, %v1043
      %v1239 = vpack.c.b16 %v1046, %v1045
      %v1240 = vpack.c.b16 %v1048, %v1047
      %v1241 = vpack.c.b16 %v1050, %v1049
      %v1242 = vpack.c.b16 %v1052, %v1051
      %v1243 = vpack.c.b16 %v1054, %v1053
      %v1244 = vpack.c.b16 %v1056, %v1055
      %v1245 = vpack.c.b16 %v1058, %v1057
      %v1246 = vpack.c.b16 %v1060, %v1059
      %v1247 = vpack.c.b16 %v1062, %v1061
      %v1248 = vpack.c.b16 %v1064, %v1063
      %v1249 = vpack.c.b16 %v1066, %v1065
      %v1250 = vpack.c.b16 %v1068, %v1067
      %v1251 = vpack.c.b16 %v1070, %v1069
      %v1252 = vpack.c.b16 %v1072, %v1071
      %v1253 = vpack.c.b16 %v1074, %v1073
      %v1254 = vpack.c.b16 %v1076, %v1075
      %v1255 = vpack.c.b16 %v1078, %v1077
      %v1256 = vpack.c.b16 %v1080, %v1079
      %v1257 = vpack.c.b16 %v1082, %v1081
      %v1258 = vpack.c.b16 %v1084, %v1083
      %v1259 = vpack.c.b16 %v1086, %v1085
      %v1260 = vpack.c.b16 %v1088, %v1087
      %v1261 = vpack.c.b16 %v1090, %v1089
      %v1262 = vpack.c.b16 %v1092, %v1091
      %v1263 = vpack.c.b16 %v1094, %v1093
      %v1264 = vpack.c.b16 %v1096, %v1095
      %v1265 = vpack.c.b16 %v1098, %v1097
      %v1266 = vpack.c.b16 %v1100, %v1099
      %v1267 = vpack.c.b16 %v1102, %v1101
      %v1268 = vpack.c.b16 %v1104, %v1103
      %v1269 = vpack.c.b16 %v1106, %v1105
      %v1270 = vpack.c.b16 %v1108, %v1107
      %v1271 = vpack.c.b16 %v1110, %v1109
      %v1272 = vpack.c.b16 %v1112, %v1111
      %v1273 = vpack.c.b16 %v1114, %v1113
      %v1274 = vpack.c.b16 %v1116, %v1115
      %v1275 = vpack.c.b16 %v1118, %v1117
      %v1276 = vpack.c.b16 %v1120, %v1119
      %v1277 = vpack.c.b16 %v1122, %v1121
      %v1278 = vpack.c.b16 %v1124, %v1123
      %v1279 = vpack.c.b16 %v1126, %v1125
      %v1280 = vpack.c.b16 %v1128, %v1127
      %v1281 = vpack.c.b16 %v1130, %v1129
      %v1282 = vpack.c.b16 %v1132, %v1131
      %v1283 = vpack.c.b16 %v1134, %v1133
      %v1284 = vpack.c.b16 %v1136, %v1135
      %v1285 = vpack.c.b16 %v1138, %v1137
      %v1286 = vpack.c.b16 %v1140, %v1139
      %v1287 = vpack.c.b16 %v1142, %v1141
      %v1288 = vpack.c.b16 %v1144, %v1143
      %1433 = vmatprep.subr.bf16.mxu0 0
      %1434 = vmatpush1.bf16.msra.mxu0 %v1145
      %1435 = vmatprep.subr.bf16.mxu0 0
      %1436 = vmatpush1.bf16.msra.mxu0 %v1146
      %1437 = vmatprep.subr.bf16.mxu0 0
      %1438 = vmatpush1.bf16.msra.mxu0 %v1147
      %1439 = vmatprep.subr.bf16.mxu0 0
      %1440 = vmatpush1.bf16.msra.mxu0 %v1148
      %1441 = vmatprep.subr.bf16.mxu0 0
      %1442 = vmatpush1.bf16.msra.mxu0 %v1149
      %1443 = vmatprep.subr.bf16.mxu0 0
      %1444 = vmatpush1.bf16.msra.mxu0 %v1150
      %1445 = vmatprep.subr.bf16.mxu0 0
      %1446 = vmatpush1.bf16.msra.mxu0 %v1151
      %1447 = vmatprep.subr.bf16.mxu0 0
      %1448 = vmatpush1.bf16.msra.mxu0 %v1152
      %1449 = vmatprep.subr.bf16.mxu0 0
      %1450 = vmatpush1.bf16.msra.mxu0 %v1153
      %1451 = vmatprep.subr.bf16.mxu0 0
      %1452 = vmatpush1.bf16.msra.mxu0 %v1154
      %1453 = vmatprep.subr.bf16.mxu0 0
      %1454 = vmatpush1.bf16.msra.mxu0 %v1155
      %1455 = vmatprep.subr.bf16.mxu0 0
      %1456 = vmatpush1.bf16.msra.mxu0 %v1156
      %1457 = vmatprep.subr.bf16.mxu0 0
      %1458 = vmatpush1.bf16.msra.mxu0 %v1157
      %1459 = vmatprep.subr.bf16.mxu0 0
      %1460 = vmatpush1.bf16.msra.mxu0 %v1158
      %1461 = vmatprep.subr.bf16.mxu0 0
      %1462 = vmatpush1.bf16.msra.mxu0 %v1159
      %1463 = vmatprep.subr.bf16.mxu0 0
      %1464 = vmatpush1.bf16.msra.mxu0 %v1160
      %1465 = vmatprep.mubr.bf16.mxu0 %v263
      %1466 = vmatmul.mubr.bf16.gmra.mrb[0].mxu0 %v262
      %v1467 = vpop.f32.mrb[0].mxu0
      %v1468 = vadd.f32 0.0, %v1467
      %v1469 = vpop.f32.mrb[0].mxu0
      %v1470 = vpop.f32.mrb[0].mxu0
      %v1471 = vpop.f32.mrb[0].mxu0
      %1472 = vdwg.mxu0
      %1473 = vmatprep.subr.bf16.mxu0 0
      %1474 = vmatpush1.bf16.msra.mxu0 %v1161
      %1475 = vmatprep.subr.bf16.mxu0 0
      %1476 = vmatpush1.bf16.msra.mxu0 %v1162
      %1477 = vmatprep.subr.bf16.mxu0 0
      %1478 = vmatpush1.bf16.msra.mxu0 %v1163
      %1479 = vmatprep.subr.bf16.mxu0 0
      %1480 = vmatpush1.bf16.msra.mxu0 %v1164
      %1481 = vmatprep.subr.bf16.mxu0 0
      %1482 = vmatpush1.bf16.msra.mxu0 %v1165
      %1483 = vmatprep.subr.bf16.mxu0 0
      %1484 = vmatpush1.bf16.msra.mxu0 %v1166
      %1485 = vmatprep.subr.bf16.mxu0 0
      %1486 = vmatpush1.bf16.msra.mxu0 %v1167
      %1487 = vmatprep.subr.bf16.mxu0 0
      %1488 = vmatpush1.bf16.msra.mxu0 %v1168
      %1489 = vmatprep.subr.bf16.mxu0 0
      %1490 = vmatpush1.bf16.msra.mxu0 %v1169
      %1491 = vmatprep.subr.bf16.mxu0 0
      %1492 = vmatpush1.bf16.msra.mxu0 %v1170
      %1493 = vmatprep.subr.bf16.mxu0 0
      %1494 = vmatpush1.bf16.msra.mxu0 %v1171
      %1495 = vmatprep.subr.bf16.mxu0 0
      %1496 = vmatpush1.bf16.msra.mxu0 %v1172
      %1497 = vmatprep.subr.bf16.mxu0 0
      %1498 = vmatpush1.bf16.msra.mxu0 %v1173
      %1499 = vmatprep.subr.bf16.mxu0 0
      %1500 = vmatpush1.bf16.msra.mxu0 %v1174
      %1501 = vmatprep.subr.bf16.mxu0 0
      %1502 = vmatpush1.bf16.msra.mxu0 %v1175
      %1503 = vmatprep.subr.bf16.mxu0 0
      %1504 = vmatpush1.bf16.msra.mxu0 %v1176
      %1505 = vmatprep.mubr.bf16.mxu0 %v265
      %1506 = vmatmul.mubr.bf16.gmra.mrb[0].mxu0 %v264
      %v1507 = vpop.f32.mrb[0].mxu0
      %v1508 = vadd.f32 %v1468, %v1507
      %v1509 = vpop.f32.mrb[0].mxu0
      %v1510 = vpop.f32.mrb[0].mxu0
      %v1511 = vpop.f32.mrb[0].mxu0
      %1512 = vdwg.mxu0
      %1513 = vmatprep.subr.bf16.mxu0 0
      %1514 = vmatpush1.bf16.msra.mxu0 %v1177
      %1515 = vmatprep.subr.bf16.mxu0 0
      %1516 = vmatpush1.bf16.msra.mxu0 %v1178
      %1517 = vmatprep.subr.bf16.mxu0 0
      %1518 = vmatpush1.bf16.msra.mxu0 %v1179
      %1519 = vmatprep.subr.bf16.mxu0 0
      %1520 = vmatpush1.bf16.msra.mxu0 %v1180
      %1521 = vmatprep.subr.bf16.mxu0 0
      %1522 = vmatpush1.bf16.msra.mxu0 %v1181
      %1523 = vmatprep.subr.bf16.mxu0 0
      %1524 = vmatpush1.bf16.msra.mxu0 %v1182
      %1525 = vmatprep.subr.bf16.mxu0 0
      %1526 = vmatpush1.bf16.msra.mxu0 %v1183
      %1527 = vmatprep.subr.bf16.mxu0 0
      %1528 = vmatpush1.bf16.msra.mxu0 %v1184
      %1529 = vmatprep.subr.bf16.mxu0 0
      %1530 = vmatpush1.bf16.msra.mxu0 %v1185
      %1531 = vmatprep.subr.bf16.mxu0 0
      %1532 = vmatpush1.bf16.msra.mxu0 %v1186
      %1533 = vmatprep.subr.bf16.mxu0 0
      %1534 = vmatpush1.bf16.msra.mxu0 %v1187
      %1535 = vmatprep.subr.bf16.mxu0 0
      %1536 = vmatpush1.bf16.msra.mxu0 %v1188
      %1537 = vmatprep.subr.bf16.mxu0 0
      %1538 = vmatpush1.bf16.msra.mxu0 %v1189
      %1539 = vmatprep.subr.bf16.mxu0 0
      %1540 = vmatpush1.bf16.msra.mxu0 %v1190
      %1541 = vmatprep.subr.bf16.mxu0 0
      %1542 = vmatpush1.bf16.msra.mxu0 %v1191
      %1543 = vmatprep.subr.bf16.mxu0 0
      %1544 = vmatpush1.bf16.msra.mxu0 %v1192
      %1545 = vmatprep.mubr.bf16.mxu0 %v267
      %1546 = vmatmul.mubr.bf16.gmra.mrb[0].mxu0 %v266
      %v1547 = vpop.f32.mrb[0].mxu0
      %v1548 = vadd.f32 %v1508, %v1547
      %v1549 = vpop.f32.mrb[0].mxu0
      %v1550 = vpop.f32.mrb[0].mxu0
      %v1551 = vpop.f32.mrb[0].mxu0
      %1552 = vdwg.mxu0
      %1553 = vmatprep.subr.bf16.mxu0 0
      %1554 = vmatpush1.bf16.msra.mxu0 %v1193
      %1555 = vmatprep.subr.bf16.mxu0 0
      %1556 = vmatpush1.bf16.msra.mxu0 %v1194
      %1557 = vmatprep.subr.bf16.mxu0 0
      %1558 = vmatpush1.bf16.msra.mxu0 %v1195
      %1559 = vmatprep.subr.bf16.mxu0 0
      %1560 = vmatpush1.bf16.msra.mxu0 %v1196
      %1561 = vmatprep.subr.bf16.mxu0 0
      %1562 = vmatpush1.bf16.msra.mxu0 %v1197
      %1563 = vmatprep.subr.bf16.mxu0 0
      %1564 = vmatpush1.bf16.msra.mxu0 %v1198
      %1565 = vmatprep.subr.bf16.mxu0 0
      %1566 = vmatpush1.bf16.msra.mxu0 %v1199
      %1567 = vmatprep.subr.bf16.mxu0 0
      %1568 = vmatpush1.bf16.msra.mxu0 %v1200
      %1569 = vmatprep.subr.bf16.mxu0 0
      %1570 = vmatpush1.bf16.msra.mxu0 %v1201
      %1571 = vmatprep.subr.bf16.mxu0 0
      %1572 = vmatpush1.bf16.msra.mxu0 %v1202
      %1573 = vmatprep.subr.bf16.mxu0 0
      %1574 = vmatpush1.bf16.msra.mxu0 %v1203
      %1575 = vmatprep.subr.bf16.mxu0 0
      %1576 = vmatpush1.bf16.msra.mxu0 %v1204
      %1577 = vmatprep.subr.bf16.mxu0 0
      %1578 = vmatpush1.bf16.msra.mxu0 %v1205
      %1579 = vmatprep.subr.bf16.mxu0 0
      %1580 = vmatpush1.bf16.msra.mxu0 %v1206
      %1581 = vmatprep.subr.bf16.mxu0 0
      %1582 = vmatpush1.bf16.msra.mxu0 %v1207
      %1583 = vmatprep.subr.bf16.mxu0 0
      %1584 = vmatpush1.bf16.msra.mxu0 %v1208
      %1585 = vmatprep.mubr.bf16.mxu0 %v269
      %1586 = vmatmul.mubr.bf16.gmra.mrb[0].mxu0 %v268
      %v1587 = vpop.f32.mrb[0].mxu0
      %v1588 = vadd.f32 %v1548, %v1587
      %v1589 = vpop.f32.mrb[0].mxu0
      %v1590 = vpop.f32.mrb[0].mxu0
      %v1591 = vpop.f32.mrb[0].mxu0
      %1592 = vdwg.mxu0
      %1593 = vmatprep.subr.bf16.mxu0 0
      %1594 = vmatpush1.bf16.msra.mxu0 %v1209
      %1595 = vmatprep.subr.bf16.mxu0 0
      %1596 = vmatpush1.bf16.msra.mxu0 %v1210
      %1597 = vmatprep.subr.bf16.mxu0 0
      %1598 = vmatpush1.bf16.msra.mxu0 %v1211
      %1599 = vmatprep.subr.bf16.mxu0 0
      %1600 = vmatpush1.bf16.msra.mxu0 %v1212
      %1601 = vmatprep.subr.bf16.mxu0 0
      %1602 = vmatpush1.bf16.msra.mxu0 %v1213
      %1603 = vmatprep.subr.bf16.mxu0 0
      %1604 = vmatpush1.bf16.msra.mxu0 %v1214
      %1605 = vmatprep.subr.bf16.mxu0 0
      %1606 = vmatpush1.bf16.msra.mxu0 %v1215
      %1607 = vmatprep.subr.bf16.mxu0 0
      %1608 = vmatpush1.bf16.msra.mxu0 %v1216
      %1609 = vmatprep.subr.bf16.mxu0 0
      %1610 = vmatpush1.bf16.msra.mxu0 %v1217
      %1611 = vmatprep.subr.bf16.mxu0 0
      %1612 = vmatpush1.bf16.msra.mxu0 %v1218
      %1613 = vmatprep.subr.bf16.mxu0 0
      %1614 = vmatpush1.bf16.msra.mxu0 %v1219
      %1615 = vmatprep.subr.bf16.mxu0 0
      %1616 = vmatpush1.bf16.msra.mxu0 %v1220
      %1617 = vmatprep.subr.bf16.mxu0 0
      %1618 = vmatpush1.bf16.msra.mxu0 %v1221
      %1619 = vmatprep.subr.bf16.mxu0 0
      %1620 = vmatpush1.bf16.msra.mxu0 %v1222
      %1621 = vmatprep.subr.bf16.mxu0 0
      %1622 = vmatpush1.bf16.msra.mxu0 %v1223
      %1623 = vmatprep.subr.bf16.mxu0 0
      %1624 = vmatpush1.bf16.msra.mxu0 %v1224
      %1625 = vmatprep.mubr.bf16.mxu0 %v271
      %1626 = vmatmul.mubr.bf16.gmra.mrb[0].mxu0 %v270
      %v1627 = vpop.f32.mrb[0].mxu0
      %v1628 = vadd.f32 %v1588, %v1627
      %v1629 = vpop.f32.mrb[0].mxu0
      %v1630 = vpop.f32.mrb[0].mxu0
      %v1631 = vpop.f32.mrb[0].mxu0
      %1632 = vdwg.mxu0
      %1633 = vmatprep.subr.bf16.mxu0 0
      %1634 = vmatpush1.bf16.msra.mxu0 %v1225
      %1635 = vmatprep.subr.bf16.mxu0 0
      %1636 = vmatpush1.bf16.msra.mxu0 %v1226
      %1637 = vmatprep.subr.bf16.mxu0 0
      %1638 = vmatpush1.bf16.msra.mxu0 %v1227
      %1639 = vmatprep.subr.bf16.mxu0 0
      %1640 = vmatpush1.bf16.msra.mxu0 %v1228
      %1641 = vmatprep.subr.bf16.mxu0 0
      %1642 = vmatpush1.bf16.msra.mxu0 %v1229
      %1643 = vmatprep.subr.bf16.mxu0 0
      %1644 = vmatpush1.bf16.msra.mxu0 %v1230
      %1645 = vmatprep.subr.bf16.mxu0 0
      %1646 = vmatpush1.bf16.msra.mxu0 %v1231
      %1647 = vmatprep.subr.bf16.mxu0 0
      %1648 = vmatpush1.bf16.msra.mxu0 %v1232
      %1649 = vmatprep.subr.bf16.mxu0 0
      %1650 = vmatpush1.bf16.msra.mxu0 %v1233
      %1651 = vmatprep.subr.bf16.mxu0 0
      %1652 = vmatpush1.bf16.msra.mxu0 %v1234
      %1653 = vmatprep.subr.bf16.mxu0 0
      %1654 = vmatpush1.bf16.msra.mxu0 %v1235
      %1655 = vmatprep.subr.bf16.mxu0 0
      %1656 = vmatpush1.bf16.msra.mxu0 %v1236
      %1657 = vmatprep.subr.bf16.mxu0 0
      %1658 = vmatpush1.bf16.msra.mxu0 %v1237
      %1659 = vmatprep.subr.bf16.mxu0 0
      %1660 = vmatpush1.bf16.msra.mxu0 %v1238
      %1661 = vmatprep.subr.bf16.mxu0 0
      %1662 = vmatpush1.bf16.msra.mxu0 %v1239
      %1663 = vmatprep.subr.bf16.mxu0 0
      %1664 = vmatpush1.bf16.msra.mxu0 %v1240
      %1665 = vmatprep.mubr.bf16.mxu0 %v273
      %1666 = vmatmul.mubr.bf16.gmra.mrb[0].mxu0 %v272
      %v1667 = vpop.f32.mrb[0].mxu0
      %v1668 = vadd.f32 %v1628, %v1667
      %v1669 = vpop.f32.mrb[0].mxu0
      %v1670 = vpop.f32.mrb[0].mxu0
      %v1671 = vpop.f32.mrb[0].mxu0
      %1672 = vdwg.mxu0
      %1673 = vmatprep.subr.bf16.mxu0 0
      %1674 = vmatpush1.bf16.msra.mxu0 %v1241
      %1675 = vmatprep.subr.bf16.mxu0 0
      %1676 = vmatpush1.bf16.msra.mxu0 %v1242
      %1677 = vmatprep.subr.bf16.mxu0 0
      %1678 = vmatpush1.bf16.msra.mxu0 %v1243
      %1679 = vmatprep.subr.bf16.mxu0 0
      %1680 = vmatpush1.bf16.msra.mxu0 %v1244
      %1681 = vmatprep.subr.bf16.mxu0 0
      %1682 = vmatpush1.bf16.msra.mxu0 %v1245
      %1683 = vmatprep.subr.bf16.mxu0 0
      %1684 = vmatpush1.bf16.msra.mxu0 %v1246
      %1685 = vmatprep.subr.bf16.mxu0 0
      %1686 = vmatpush1.bf16.msra.mxu0 %v1247
      %1687 = vmatprep.subr.bf16.mxu0 0
      %1688 = vmatpush1.bf16.msra.mxu0 %v1248
      %1689 = vmatprep.subr.bf16.mxu0 0
      %1690 = vmatpush1.bf16.msra.mxu0 %v1249
      %1691 = vmatprep.subr.bf16.mxu0 0
      %1692 = vmatpush1.bf16.msra.mxu0 %v1250
      %1693 = vmatprep.subr.bf16.mxu0 0
      %1694 = vmatpush1.bf16.msra.mxu0 %v1251
      %1695 = vmatprep.subr.bf16.mxu0 0
      %1696 = vmatpush1.bf16.msra.mxu0 %v1252
      %1697 = vmatprep.subr.bf16.mxu0 0
      %1698 = vmatpush1.bf16.msra.mxu0 %v1253
      %1699 = vmatprep.subr.bf16.mxu0 0
      %1700 = vmatpush1.bf16.msra.mxu0 %v1254
      %1701 = vmatprep.subr.bf16.mxu0 0
      %1702 = vmatpush1.bf16.msra.mxu0 %v1255
      %1703 = vmatprep.subr.bf16.mxu0 0
      %1704 = vmatpush1.bf16.msra.mxu0 %v1256
      %1705 = vmatprep.mubr.bf16.mxu0 %v275
      %1706 = vmatmul.mubr.bf16.gmra.mrb[0].mxu0 %v274
      %v1707 = vpop.f32.mrb[0].mxu0
      %v1708 = vadd.f32 %v1668, %v1707
      %v1709 = vpop.f32.mrb[0].mxu0
      %v1710 = vpop.f32.mrb[0].mxu0
      %v1711 = vpop.f32.mrb[0].mxu0
      %1712 = vdwg.mxu0
      %1713 = vmatprep.subr.bf16.mxu0 0
      %1714 = vmatpush1.bf16.msra.mxu0 %v1257
      %1715 = vmatprep.subr.bf16.mxu0 0
      %1716 = vmatpush1.bf16.msra.mxu0 %v1258
      %1717 = vmatprep.subr.bf16.mxu0 0
      %1718 = vmatpush1.bf16.msra.mxu0 %v1259
      %1719 = vmatprep.subr.bf16.mxu0 0
      %1720 = vmatpush1.bf16.msra.mxu0 %v1260
      %1721 = vmatprep.subr.bf16.mxu0 0
      %1722 = vmatpush1.bf16.msra.mxu0 %v1261
      %1723 = vmatprep.subr.bf16.mxu0 0
      %1724 = vmatpush1.bf16.msra.mxu0 %v1262
      %1725 = vmatprep.subr.bf16.mxu0 0
      %1726 = vmatpush1.bf16.msra.mxu0 %v1263
      %1727 = vmatprep.subr.bf16.mxu0 0
      %1728 = vmatpush1.bf16.msra.mxu0 %v1264
      %1729 = vmatprep.subr.bf16.mxu0 0
      %1730 = vmatpush1.bf16.msra.mxu0 %v1265
      %1731 = vmatprep.subr.bf16.mxu0 0
      %1732 = vmatpush1.bf16.msra.mxu0 %v1266
      %1733 = vmatprep.subr.bf16.mxu0 0
      %1734 = vmatpush1.bf16.msra.mxu0 %v1267
      %1735 = vmatprep.subr.bf16.mxu0 0
      %1736 = vmatpush1.bf16.msra.mxu0 %v1268
      %1737 = vmatprep.subr.bf16.mxu0 0
      %1738 = vmatpush1.bf16.msra.mxu0 %v1269
      %1739 = vmatprep.subr.bf16.mxu0 0
      %1740 = vmatpush1.bf16.msra.mxu0 %v1270
      %1741 = vmatprep.subr.bf16.mxu0 0
      %1742 = vmatpush1.bf16.msra.mxu0 %v1271
      %1743 = vmatprep.subr.bf16.mxu0 0
      %1744 = vmatpush1.bf16.msra.mxu0 %v1272
      %1745 = vmatprep.mubr.bf16.mxu0 %v277
      %1746 = vmatmul.mubr.bf16.gmra.mrb[0].mxu0 %v276
      %v1747 = vpop.f32.mrb[0].mxu0
      %v1748 = vadd.f32 %v1708, %v1747
      %v1749 = vpop.f32.mrb[0].mxu0
      %v1750 = vpop.f32.mrb[0].mxu0
      %v1751 = vpop.f32.mrb[0].mxu0
      %1752 = vdwg.mxu0
      %1753 = vmatprep.subr.bf16.mxu0 0
      %1754 = vmatpush1.bf16.msra.mxu0 %v1273
      %1755 = vmatprep.subr.bf16.mxu0 0
      %1756 = vmatpush1.bf16.msra.mxu0 %v1274
      %1757 = vmatprep.subr.bf16.mxu0 0
      %1758 = vmatpush1.bf16.msra.mxu0 %v1275
      %1759 = vmatprep.subr.bf16.mxu0 0
      %1760 = vmatpush1.bf16.msra.mxu0 %v1276
      %1761 = vmatprep.subr.bf16.mxu0 0
      %1762 = vmatpush1.bf16.msra.mxu0 %v1277
      %1763 = vmatprep.subr.bf16.mxu0 0
      %1764 = vmatpush1.bf16.msra.mxu0 %v1278
      %1765 = vmatprep.subr.bf16.mxu0 0
      %1766 = vmatpush1.bf16.msra.mxu0 %v1279
      %1767 = vmatprep.subr.bf16.mxu0 0
      %1768 = vmatpush1.bf16.msra.mxu0 %v1280
      %1769 = vmatprep.subr.bf16.mxu0 0
      %1770 = vmatpush1.bf16.msra.mxu0 %v1281
      %1771 = vmatprep.subr.bf16.mxu0 0
      %1772 = vmatpush1.bf16.msra.mxu0 %v1282
      %1773 = vmatprep.subr.bf16.mxu0 0
      %1774 = vmatpush1.bf16.msra.mxu0 %v1283
      %1775 = vmatprep.subr.bf16.mxu0 0
      %1776 = vmatpush1.bf16.msra.mxu0 %v1284
      %1777 = vmatprep.subr.bf16.mxu0 0
      %1778 = vmatpush1.bf16.msra.mxu0 %v1285
      %1779 = vmatprep.subr.bf16.mxu0 0
      %1780 = vmatpush1.bf16.msra.mxu0 %v1286
      %1781 = vmatprep.subr.bf16.mxu0 0
      %1782 = vmatpush1.bf16.msra.mxu0 %v1287
      %1783 = vmatprep.subr.bf16.mxu0 0
      %1784 = vmatpush1.bf16.msra.mxu0 %v1288
      %1785 = vmatprep.mubr.bf16.mxu0 %v279
      %1786 = vmatmul.mubr.bf16.gmra.mrb[0].mxu0 %v278
      %v1787 = vpop.f32.mrb[0].mxu0
      %v1788 = vadd.f32 %v1748, %v1787
      %v1789 = vpop.f32.mrb[0].mxu0
      %v1790 = vpop.f32.mrb[0].mxu0
      %v1791 = vpop.f32.mrb[0].mxu0
      %1792 = vdwg.mxu0
      %v1793 = vadd.f32 %v280, %v1788
      %1794 = vst [vmem:[#allocation2] sm:$0xf] %v1793
      %p1795 = scmp.eq.s32.totalorder %s14, 1
      // Predicated region
      $region37: #{l2constrained_forward.3} parent=31 // pred_check
        %p1796 = pneg %p1795
      $region38: #{l2constrained_forward.3} parent=31 // pred_check_branch
        %1798 = sbr.rel (%p1796) target = $region40
      $region39: #{l2constrained_forward.3} parent=31 // pred_region
        %v1799 = vld [vmem:[#allocation2] sm:$0xf]
        %v1800 = vmul.f32 %v1799, %v1799
        %vm1801 = vcmask 1043456
        %v1802 = vsel %vm1801, %v1800, 0.0
        %1803 = vadd.xlane.f32.xlu0 %v1802
        %v1804 = vpop.xlane.xlu0 %1803
        %v1805 = vrsqrt.pop %v1804
        %v1806 = vmul.f32 %v1804, %v1805
        %vm1807 = vcmp.eq.f32.partialorder %v1804, inf
        %v1808 = vsel %vm1807, %v1804, %v1806
        %vm1809 = vcmp.eq.f32.partialorder %v1804, 0.0
        %v1810 = vand.u32 %v1804, 2147483648
        %v1811 = vsel %vm1809, %v1810, %v1808
        %v1812 = vmul.f32 %v1799, 16.0
        %v1813 = vadd.f32 %v1811, 1e-10
        %v1814 = vrcp.pop %v1813
        %v1815 = vmul.f32 %v1812, %v1814
        %1816 = vst [vmem:[%s3] sm:$0xf] %v1815
      $region40: #{l2constrained_forward.3} parent=31 // pred_fallthru
        _
      // Predicated region
      $region41: #{l2constrained_forward.3} parent=31 // pred_check
        %p1817 = pneg %p105
      $region42: #{l2constrained_forward.3} parent=31 // pred_check_branch
        %1819 = sbr.rel (%p1817) target = $region44
      $region43: #{l2constrained_forward.3} parent=31 // pred_region
        _
      $region44: #{l2constrained_forward.3} parent=31 // pred_fallthru
        _
      // Predicated region
      $region45: #{l2constrained_forward.3} parent=31 // pred_check
        %p1820 = pneg %p105
      $region46: #{l2constrained_forward.3} parent=31 // pred_check_branch
        %1822 = sbr.rel (%p1820) target = $region48
      $region47: #{l2constrained_forward.3} parent=31 // pred_region
        _
      $region48: #{l2constrained_forward.3} parent=31 // pred_fallthru
        _
    $region32: #{l2constrained_forward.3} parent=5 // pred_fallthru
      _
    %p1823 = scmp.le.s32.totalorder 2, %s9
    // Predicated region
    $region49: #{l2constrained_forward.3} parent=5 // pred_check
      %p1824 = pneg %p1823
    $region50: #{l2constrained_forward.3} parent=5 // pred_check_branch
      %1826 = sbr.rel (%p1824) target = $region52
    $region51: #{l2constrained_forward.3} parent=5 // pred_region
      %s1827 = ssub.s32 %s9, 2
    $region52: #{l2constrained_forward.3} parent=5 // pred_fallthru
      _
  $region6: #{l2constrained_forward.3} parent=0 // loop_footer
    %s13 = sadd.s32 1, %s9
  $region7: #{l2constrained_forward.3} parent=0 // loop_footer_branch
    %8 = sbr.rel target = $region3
  $region8: #{l2constrained_forward.3} parent=0 // loop_exit
    _

</llo_original>
